<compile_context>
chip_gen: v7x
topology: tpu7x:2x2x1
jax: 0.10.0
libtpu: 0.0.40
codegen_flags: <defaults>
</compile_context>

<pallas_src>
import functools

import jax
import jax.numpy as jnp
from jax.experimental import pallas as pl
from jax.experimental.pallas import tpu as pltpu

_LN_EPS = 1e-5  # PyTorch LayerNorm default

# Flipped off at runtime if this jax build rejects single-buffered
# (pl.Buffered(1)) weight BlockSpecs; the kernel then uses default buffering.
_SINGLE_BUFFER_WEIGHTS_OK = True


def _round_up(x, m):
    return (x + m - 1) // m * m


def _gpcritic_kernel(obs_ref, act_ref, wt_ref, w1h_ref, w1a_ref, w2_ref,
                     vec_ref, out_ref, acc_ref, *, F, H):
    r = pl.program_id(2)

    # ---- trunk matmul, accumulated (f32) over the R (repr_dim) grid axis ----
    @pl.when(r == 0)
    def _():
        acc_ref[...] = jnp.zeros_like(acc_ref)

    acc_ref[...] += jnp.dot(obs_ref[0], wt_ref[0],
                            preferred_element_type=jnp.float32)

    # ---- finalize on the last R step: LN -> tanh -> QS MLP -> lane-dense out
    @pl.when(r == pl.num_programs(2) - 1)
    def _():
        # Packed per-critic vectors (one fat DMA, f32): rows are
        # 0:bt  1:ln_gamma  2:ln_beta  3:b1  4:b2  5:w3(row)  6:b3
        bt = vec_ref[0, 0:1, :F]
        g = vec_ref[0, 1:2, :F]
        be = vec_ref[0, 2:3, :F]
        b1 = vec_ref[0, 3:4, :H]
        b2 = vec_ref[0, 4:5, :H]
        w3r = vec_ref[0, 5:6, :H]
        b3 = vec_ref[0, 6:7, 0:1]

        # LayerNorm (f32 stats) + tanh (EUP)
        t = acc_ref[...] + bt
        mu = jnp.mean(t, axis=-1, keepdims=True)
        var = jnp.mean(jnp.square(t - mu), axis=-1, keepdims=True)
        h = jnp.tanh((t - mu) * jax.lax.rsqrt(var + _LN_EPS) * g + be)

        # concat([h, action]) @ W1 == h @ W1h + action @ W1a; W1 was split in
        # the wrapper so both contraction dims are sublane (8) aligned.
        q = (jnp.dot(h.astype(w1h_ref.dtype), w1h_ref[0],
                     preferred_element_type=jnp.float32)
             + jnp.dot(act_ref[...], w1a_ref[0],
                       preferred_element_type=jnp.float32)
             + b1)
        q = jnp.maximum(q, 0.0)

        q = jnp.dot(q.astype(w2_ref.dtype), w2_ref[0],
                    preferred_element_type=jnp.float32) + b2
        q = jnp.maximum(q, 0.0)

        # Final H->1 layer: VPU multiply + lane reduction (avoids an N=1 MXU
        # matmul) producing a lane-dense (1, tb) row for an unmasked store.
        qrow = jnp.sum(q * w3r, axis=-1)[None, :] + b3   # (1, tb)
        out_ref[0] = qrow.astype(out_ref.dtype)


def _pack_vectors(params, width):
    """Pack all small per-critic vectors into one (P, 7, width) f32 array."""
    P = params["bt"].shape[0]

    def row(v):
        v = v.reshape(P, 1, -1)
        return jnp.pad(v, ((0, 0), (0, 0), (0, width - v.shape[-1])))

    return jnp.concatenate(
        [row(params["bt"]), row(params["ln_g"]), row(params["ln_b"]),
         row(params["b1"]), row(params["b2"]),
         row(jnp.swapaxes(params["w3"], 1, 2)),   # w3 stored as a (1, H) row
         row(params["b3"])],
        axis=1).astype(jnp.float32)               # (P, 7, width)


def gpcritic_forward(obs, action, params, *, tb=None, tr=None,
                     compute_dtype=jnp.bfloat16):
    """GPCritic.forward.  `obs` are the ParallelEncoder output features (P,B,R)."""
    P, B, R = obs.shape
    A = action.shape[-1]
    F = params["wt"].shape[-1]
    H = params["w2"].shape[-1]
    W = max(F, H)
    in_bytes = jnp.dtype(compute_dtype).itemsize

    # ---- tile selection: never fall back to raw (unpadded) full extents ----
    # repr_dim tile: multiple of 128, capped so the double-buffered obs / wt
    # tiles stay bounded even for production repr_dim (e.g. 39200 on DrQ).
    if tr is None:
        tr = min(_round_up(R, 128), 1024 if in_bytes <= 2 else 512)
    assert tr % 128 == 0
    R_pad = _round_up(R, tr)

    # batch tile: prefer the whole (8-aligned) batch so each wt block is
    # streamed exactly once per critic; otherwise 256 rows (multiple of 128,
    # keeping the lane-dense output block aligned).  v7x megacore: parallel
    # grid extent is P * (B_pad // tb); with an ensemble (P >= 2) both
    # TensorCores stay fed even when tb == B_pad.
    if tb is None:
        tb = _round_up(B, 8)
        if tb * tr * in_bytes > 4 * 1024 * 1024 or tb > 1024:
            tb = 256
    B_pad = _round_up(B, tb)
    assert tb == B_pad or tb % 128 == 0, "output block must stay lane-aligned"

    A_pad = _round_up(A, 8)   # 8-aligned contraction dim for the action matmul

    # ---- pad (zeros contribute nothing to the reduction) and cast ----
    obs_p = jnp.pad(obs, ((0, 0), (0, B_pad - B), (0, R_pad - R)))
    act_p = jnp.pad(action, ((0, B_pad - B), (0, A_pad - A)))
    wt_p = jnp.pad(params["wt"], ((0, 0), (0, R_pad - R), (0, 0)))
    w1h = params["w1"][:, :F, :]
    w1a = jnp.pad(params["w1"][:, F:, :], ((0, 0), (0, A_pad - A), (0, 0)))

    # bf16 input streams (trunk is HBM-bandwidth bound); accumulation, LN
    # stats and all biases stay f32 inside the kernel.
    obs_p, act_p, wt_p, w1h, w1a, w2 = (
        x.astype(compute_dtype)
        for x in (obs_p, act_p, wt_p, w1h, w1a, params["w2"]))

    vecs = _pack_vectors(params, W)   # one DMA per critic instead of seven

    # ---- explicit VMEM budget: the scoped default (16/32/32 MiB on
    # v5e/v6e/v7x), not physical VMEM, is what gates tile size ----
    vmem_need = (
        2 * tb * tr * in_bytes                         # obs tile (double buf)
        + 2 * tr * F * in_bytes                        # trunk weight tile
        + 2 * tb * A_pad * in_bytes                    # action tile
        + 2 * (F * H + A_pad * H + H * H) * in_bytes   # w1h, w1a, w2
        + 2 * 7 * W * 4                                # packed vectors
        + 2 * tb * 4                                   # output tile
        + tb * F * 4                                   # trunk accumulator
        + tb * (F + 2 * H) * 4                         # finalize temporaries
    )
    vmem_limit = int(min(max(2 * vmem_need, 16 * 1024 * 1024),
                         64 * 1024 * 1024))

    grid = (P, B_pad // tb, R_pad // tr)
    kernel = functools.partial(_gpcritic_kernel, F=F, H=H)

    def make_call(single_buffer_weights):
        def wspec(shape):
            # p-invariant weights: single-buffer to free VMEM headroom
            # (matters on v7x's 64 MiB VMEM with production H).
            if single_buffer_weights:
                return pl.BlockSpec(shape, lambda p, b, r: (p, 0, 0),
                                    pipeline_mode=pl.Buffered(1))
            return pl.BlockSpec(shape, lambda p, b, r: (p, 0, 0))

        return pl.pallas_call(
            kernel,
            out_shape=jax.ShapeDtypeStruct((P, 1, B_pad), jnp.float32),
            grid_spec=pltpu.PrefetchScalarGridSpec(
                num_scalar_prefetch=0,
                grid=grid,
                in_specs=[
                    pl.BlockSpec((1, tb, tr), lambda p, b, r: (p, b, r)),  # obs
                    pl.BlockSpec((tb, A_pad), lambda p, b, r: (b, 0)),     # action
                    pl.BlockSpec((1, tr, F), lambda p, b, r: (p, r, 0)),   # trunk W
                    wspec((1, F, H)),       # W1 (h part)
                    wspec((1, A_pad, H)),   # W1 (action part)
                    wspec((1, H, H)),       # W2
                    wspec((1, 7, W)),       # packed per-critic vectors
                ],
                out_specs=pl.BlockSpec((1, 1, tb), lambda p, b, r: (p, 0, b)),
                scratch_shapes=[pltpu.VMEM((tb, F), jnp.float32)],          # trunk acc
            ),
            compiler_params=pltpu.CompilerParams(
                dimension_semantics=("parallel", "parallel", "arbitrary"),
                vmem_limit_bytes=vmem_limit),
        )

    args = (obs_p, act_p, wt_p, w1h, w1a, w2, vecs)
    global _SINGLE_BUFFER_WEIGHTS_OK
    if _SINGLE_BUFFER_WEIGHTS_OK:
        try:
            qs = make_call(True)(*args)
        except Exception:  # Buffered(1) unsupported on this build: fall back.
            _SINGLE_BUFFER_WEIGHTS_OK = False
            qs = make_call(False)(*args)
    else:
        qs = make_call(False)(*args)

    # (P, 1, B_pad) -> (B, P)  == torch.squeeze(torch.transpose(qs, 0, 1), -1)
    return jnp.swapaxes(qs[:, 0, :B], 0, 1)


def gpcritic_reference(obs, action, params):
    """Pure-JAX f32 reference (mirrors the PyTorch forward exactly)."""
    t = jnp.einsum("pbr,prf->pbf", obs, params["wt"]) + params["bt"]
    mu = t.mean(-1, keepdims=True)
    var = jnp.square(t - mu).mean(-1, keepdims=True)
    h = jnp.tanh((t - mu) * jax.lax.rsqrt(var + _LN_EPS) * params["ln_g"]
                 + params["ln_b"])
    act = jnp.tile(action[None], (obs.shape[0], 1, 1))
    ha = jnp.concatenate([h, act], axis=-1)
    q = jax.nn.relu(jnp.einsum("pbi,pio->pbo", ha, params["w1"]) + params["b1"])
    q = jax.nn.relu(jnp.einsum("pbi,pio->pbo", q, params["w2"]) + params["b2"])
    q = jnp.einsum("pbi,pio->pbo", q, params["w3"]) + params["b3"]
    return jnp.squeeze(jnp.swapaxes(q, 0, 1), axis=-1)


def init_params(key, P, R, F, A, H):
    ks = jax.random.split(key, 8)

    def w(k, shape):
        fan_in = shape[-2]
        return jax.random.normal(k, shape, jnp.float32) / jnp.sqrt(fan_in)

    return {
        # trunk DenseParallel(R -> F, P)
        "wt":   w(ks[0], (P, R, F)),
        "bt":   jnp.zeros((P, 1, F), jnp.float32),
        # ParallelLayerNorm(F)
        "ln_g": jnp.ones((P, 1, F), jnp.float32),
        "ln_b": jnp.zeros((P, 1, F), jnp.float32),
        # QS: DenseParallel(F+A -> H) -> DenseParallel(H -> H) -> DenseParallel(H -> 1)
        "w1":   w(ks[1], (P, F + A, H)),
        "b1":   0.01 * jax.random.normal(ks[2], (P, 1, H), jnp.float32),
        "w2":   w(ks[3], (P, H, H)),
        "b2":   0.01 * jax.random.normal(ks[4], (P, 1, H), jnp.float32),
        "w3":   w(ks[5], (P, H, 1)),
        "b3":   0.01 * jax.random.normal(ks[6], (P, 1, 1), jnp.float32),
    }


if __name__ == "__main__":
    # Small synthetic shapes consistent with GPCritic's forward.
    P, B, R, F, A, H = 2, 8, 128, 64, 4, 32

    key = jax.random.PRNGKey(0)
    k_obs, k_act, k_par, k_obs2, k_act2 = jax.random.split(key, 5)

    params = init_params(k_par, P, R, F, A, H)
    obs = jax.random.normal(k_obs, (P, B, R), jnp.float32)       # encoder output h
    action = jax.random.uniform(k_act, (B, A), jnp.float32, -1.0, 1.0)

    out = jax.block_until_ready(gpcritic_forward(obs, action, params))
    ref = gpcritic_reference(obs, action, params)
    assert out.shape == (B, P), out.shape
    # bf16 input streams -> loose tolerance vs the f32 reference.
    assert jnp.allclose(out, ref, atol=5e-2, rtol=5e-2), \
        float(jnp.max(jnp.abs(out - ref)))

    # Second config: non-128-divisible repr_dim, non-8-divisible batch, and a
    # multi-step R reduction (tr=128) -> exercises the padding + accumulator
    # paths that replaced the old full-extent tile fallback.
    P2, B2, R2 = 2, 10, 200
    params2 = init_params(jax.random.PRNGKey(1), P2, R2, F, A, H)
    obs2 = jax.random.normal(k_obs2, (P2, B2, R2), jnp.float32)
    action2 = jax.random.uniform(k_act2, (B2, A), jnp.float32, -1.0, 1.0)

    out2 = jax.block_until_ready(gpcritic_forward(obs2, action2, params2, tr=128))
    ref2 = gpcritic_reference(obs2, action2, params2)
    assert out2.shape == (B2, P2), out2.shape
    assert jnp.allclose(out2, ref2, atol=5e-2, rtol=5e-2), \
        float(jnp.max(jnp.abs(out2 - ref2)))

    print("KERNEL_OK")
</pallas_src>

<mosaic_0001>
module attributes {stable_mosaic.version = 11 : i64} {
  func.func @_gpcritic_kernel(%arg0: i32, %arg1: i32, %arg2: i32, %arg3: memref<1x8x128xbf16, #tpu.memory_space<vmem>>, %arg4: memref<8x8xbf16, #tpu.memory_space<vmem>>, %arg5: memref<1x128x64xbf16, #tpu.memory_space<vmem>>, %arg6: memref<1x64x32xbf16, #tpu.memory_space<vmem>>, %arg7: memref<1x8x32xbf16, #tpu.memory_space<vmem>>, %arg8: memref<1x32x32xbf16, #tpu.memory_space<vmem>>, %arg9: memref<1x7x64xf32, #tpu.memory_space<vmem>>, %arg10: memref<1x1x8xf32, #tpu.memory_space<vmem>>, %arg11: memref<8x64xf32, #tpu.memory_space<vmem>>) attributes {dimension_semantics = [#tpu.dimension_semantics<parallel>, #tpu.dimension_semantics<parallel>, #tpu.dimension_semantics<arbitrary>], iteration_bounds = array<i64: 2, 1, 1>, scalar_prefetch = 0 : i64, scratch_operands = 1 : i64, tpu.core_type = #tpu.core_type<tc>, window_params = [{transform_indices = @transform_0, window_bounds = array<i64: 1, 8, 128>}, {transform_indices = @transform_1, window_bounds = array<i64: 8, 8>}, {transform_indices = @transform_2, window_bounds = array<i64: 1, 128, 64>}, {pipeline_mode = #tpu.pipeline_mode<synchronous>, transform_indices = @transform_3, window_bounds = array<i64: 1, 64, 32>}, {pipeline_mode = #tpu.pipeline_mode<synchronous>, transform_indices = @transform_4, window_bounds = array<i64: 1, 8, 32>}, {pipeline_mode = #tpu.pipeline_mode<synchronous>, transform_indices = @transform_5, window_bounds = array<i64: 1, 32, 32>}, {pipeline_mode = #tpu.pipeline_mode<synchronous>, transform_indices = @transform_6, window_bounds = array<i64: 1, 7, 64>}, {transform_indices = @transform_7, window_bounds = array<i64: 1, 1, 8>}]} {
    %c0_i32 = arith.constant 0 : i32
    %0 = arith.cmpi eq, %arg2, %c0_i32 : i32
    %1 = arith.extui %0 : i1 to i32
    %c0_i32_0 = arith.constant 0 : i32
    %2 = arith.cmpi ne, %1, %c0_i32_0 : i32
    scf.if %2 {
      %cst_12 = arith.constant 0.000000e+00 : f32
      %14 = vector.broadcast %cst_12 : f32 to vector<8x64xf32>
      %c0_13 = arith.constant 0 : index
      %c0_14 = arith.constant 0 : index
      %15 = vector.load %arg11[%c0_13, %c0_14] : memref<8x64xf32, #tpu.memory_space<vmem>>, vector<8x64xf32>
      tpu.vector_store %arg11[%c0_13, %c0_14], %14 {strides = array<i32>} : memref<8x64xf32, #tpu.memory_space<vmem>>, vector<8x64xf32>,
    } else {
    }
    %c0 = arith.constant 0 : index
    %c0_1 = arith.constant 0 : index
    %3 = vector.load %arg11[%c0, %c0_1] : memref<8x64xf32, #tpu.memory_space<vmem>>, vector<8x64xf32>
    %c0_2 = arith.constant 0 : index
    %c0_3 = arith.constant 0 : index
    %c0_4 = arith.constant 0 : index
    %4 = vector.load %arg3[%c0_2, %c0_3, %c0_4] : memref<1x8x128xbf16, #tpu.memory_space<vmem>>, vector<1x8x128xbf16>
    %5 = vector.shape_cast %4 : vector<1x8x128xbf16> to vector<8x128xbf16>
    %c0_5 = arith.constant 0 : index
    %c0_6 = arith.constant 0 : index
    %c0_7 = arith.constant 0 : index
    %6 = vector.load %arg5[%c0_5, %c0_6, %c0_7] : memref<1x128x64xbf16, #tpu.memory_space<vmem>>, vector<1x128x64xbf16>
    %7 = vector.shape_cast %6 : vector<1x128x64xbf16> to vector<128x64xbf16>
    %cst = arith.constant dense<0.000000e+00> : vector<8x64xf32>
    %8 = tpu.matmul %5, %7, %cst {dimension_numbers = #tpu.dot_dimension_numbers<[1], [0], [0], [1], [0, 0, 1, 1], [], []>} : vector<8x128xbf16>, vector<128x64xbf16>, vector<8x64xf32> -> vector<8x64xf32>
    %9 = arith.addf %3, %8 : vector<8x64xf32>
    %c0_8 = arith.constant 0 : index
    %c0_9 = arith.constant 0 : index
    %10 = vector.load %arg11[%c0_8, %c0_9] : memref<8x64xf32, #tpu.memory_space<vmem>>, vector<8x64xf32>
    tpu.vector_store %arg11[%c0_8, %c0_9], %9 {strides = array<i32>} : memref<8x64xf32, #tpu.memory_space<vmem>>, vector<8x64xf32>,
    %c0_i32_10 = arith.constant 0 : i32
    %11 = arith.cmpi eq, %arg2, %c0_i32_10 : i32
    %12 = arith.extui %11 : i1 to i32
    %c0_i32_11 = arith.constant 0 : i32
    %13 = arith.cmpi ne, %12, %c0_i32_11 : i32
    scf.if %13 {
      %c0_12 = arith.constant 0 : index
      %c0_13 = arith.constant 0 : index
      %c0_14 = arith.constant 0 : index
      %14 = vector.load %arg9[%c0_12, %c0_13, %c0_14] : memref<1x7x64xf32, #tpu.memory_space<vmem>>, vector<1x1x64xf32>
      %15 = vector.shape_cast %14 : vector<1x1x64xf32> to vector<1x64xf32>
      %c0_15 = arith.constant 0 : index
      %c1 = arith.constant 1 : index
      %c0_16 = arith.constant 0 : index
      %16 = vector.load %arg9[%c0_15, %c1, %c0_16] : memref<1x7x64xf32, #tpu.memory_space<vmem>>, vector<1x1x64xf32>
      %17 = vector.shape_cast %16 : vector<1x1x64xf32> to vector<1x64xf32>
      %c0_17 = arith.constant 0 : index
      %c2 = arith.constant 2 : index
      %c0_18 = arith.constant 0 : index
      %18 = vector.load %arg9[%c0_17, %c2, %c0_18] : memref<1x7x64xf32, #tpu.memory_space<vmem>>, vector<1x1x64xf32>
      %19 = vector.shape_cast %18 : vector<1x1x64xf32> to vector<1x64xf32>
      %c0_19 = arith.constant 0 : index
      %c3 = arith.constant 3 : index
      %c0_20 = arith.constant 0 : index
      %20 = vector.load %arg9[%c0_19, %c3, %c0_20] : memref<1x7x64xf32, #tpu.memory_space<vmem>>, vector<1x1x32xf32>
      %21 = vector.shape_cast %20 : vector<1x1x32xf32> to vector<1x32xf32>
      %c0_21 = arith.constant 0 : index
      %c4 = arith.constant 4 : index
      %c0_22 = arith.constant 0 : index
      %22 = vector.load %arg9[%c0_21, %c4, %c0_22] : memref<1x7x64xf32, #tpu.memory_space<vmem>>, vector<1x1x32xf32>
      %23 = vector.shape_cast %22 : vector<1x1x32xf32> to vector<1x32xf32>
      %c0_23 = arith.constant 0 : index
      %c5 = arith.constant 5 : index
      %c0_24 = arith.constant 0 : index
      %24 = vector.load %arg9[%c0_23, %c5, %c0_24] : memref<1x7x64xf32, #tpu.memory_space<vmem>>, vector<1x1x32xf32>
      %25 = vector.shape_cast %24 : vector<1x1x32xf32> to vector<1x32xf32>
      %c0_25 = arith.constant 0 : index
      %c6 = arith.constant 6 : index
      %c0_26 = arith.constant 0 : index
      %26 = vector.load %arg9[%c0_25, %c6, %c0_26] : memref<1x7x64xf32, #tpu.memory_space<vmem>>, vector<1x1x1xf32>
      %27 = vector.shape_cast %26 : vector<1x1x1xf32> to vector<1x1xf32>
      %c0_27 = arith.constant 0 : index
      %c0_28 = arith.constant 0 : index
      %28 = vector.load %arg11[%c0_27, %c0_28] : memref<8x64xf32, #tpu.memory_space<vmem>>, vector<8x64xf32>
      %29 = vector.broadcast %15 : vector<1x64xf32> to vector<8x64xf32>
      %30 = arith.addf %28, %29 : vector<8x64xf32>
      %cst_29 = arith.constant dense<0.000000e+00> : vector<8xf32>
      %31 = vector.multi_reduction <add>, %30, %cst_29 [1] : vector<8x64xf32> to vector<8xf32>
      %32 = vector.shape_cast %31 : vector<8xf32> to vector<8x1xf32>
      %cst_30 = arith.constant 6.400000e+01 : f32
      %33 = vector.broadcast %cst_30 : f32 to vector<8x1xf32>
      %34 = arith.divf %32, %33 : vector<8x1xf32>
      %35 = vector.broadcast %34 : vector<8x1xf32> to vector<8x64xf32>
      %36 = arith.subf %30, %35 : vector<8x64xf32>
      %37 = arith.mulf %36, %36 : vector<8x64xf32>
      %cst_31 = arith.constant dense<0.000000e+00> : vector<8xf32>
      %38 = vector.multi_reduction <add>, %37, %cst_31 [1] : vector<8x64xf32> to vector<8xf32>
      %39 = vector.shape_cast %38 : vector<8xf32> to vector<8x1xf32>
      %cst_32 = arith.constant 6.400000e+01 : f32
      %40 = vector.broadcast %cst_32 : f32 to vector<8x1xf32>
      %41 = arith.divf %39, %40 : vector<8x1xf32>
      %42 = vector.broadcast %34 : vector<8x1xf32> to vector<8x64xf32>
      %43 = arith.subf %30, %42 : vector<8x64xf32>
      %cst_33 = arith.constant 9.99999974E-6 : f32
      %44 = vector.broadcast %cst_33 : f32 to vector<8x1xf32>
      %45 = arith.addf %41, %44 : vector<8x1xf32>
      %46 = math.rsqrt %45 : vector<8x1xf32>
      %47 = vector.broadcast %46 : vector<8x1xf32> to vector<8x64xf32>
      %48 = arith.mulf %43, %47 : vector<8x64xf32>
      %49 = vector.broadcast %17 : vector<1x64xf32> to vector<8x64xf32>
      %50 = arith.mulf %48, %49 : vector<8x64xf32>
      %51 = vector.broadcast %19 : vector<1x64xf32> to vector<8x64xf32>
      %52 = arith.addf %50, %51 : vector<8x64xf32>
      %53 = math.tanh %52 : vector<8x64xf32>
      %54 = arith.truncf %53 : vector<8x64xf32> to vector<8x64xbf16>
      %c0_34 = arith.constant 0 : index
      %c0_35 = arith.constant 0 : index
      %c0_36 = arith.constant 0 : index
      %55 = vector.load %arg6[%c0_34, %c0_35, %c0_36] : memref<1x64x32xbf16, #tpu.memory_space<vmem>>, vector<1x64x32xbf16>
      %56 = vector.shape_cast %55 : vector<1x64x32xbf16> to vector<64x32xbf16>
      %cst_37 = arith.constant dense<0.000000e+00> : vector<8x32xf32>
      %57 = tpu.matmul %54, %56, %cst_37 {dimension_numbers = #tpu.dot_dimension_numbers<[1], [0], [0], [1], [0, 0, 1, 1], [], []>} : vector<8x64xbf16>, vector<64x32xbf16>, vector<8x32xf32> -> vector<8x32xf32>
      %c0_38 = arith.constant 0 : index
      %c0_39 = arith.constant 0 : index
      %58 = vector.load %arg4[%c0_38, %c0_39] : memref<8x8xbf16, #tpu.memory_space<vmem>>, vector<8x8xbf16>
      %c0_40 = arith.constant 0 : index
      %c0_41 = arith.constant 0 : index
      %c0_42 = arith.constant 0 : index
      %59 = vector.load %arg7[%c0_40, %c0_41, %c0_42] : memref<1x8x32xbf16, #tpu.memory_space<vmem>>, vector<1x8x32xbf16>
      %60 = vector.shape_cast %59 : vector<1x8x32xbf16> to vector<8x32xbf16>
      %cst_43 = arith.constant dense<0.000000e+00> : vector<8x32xf32>
      %61 = tpu.matmul %58, %60, %cst_43 {dimension_numbers = #tpu.dot_dimension_numbers<[1], [0], [0], [1], [0, 0, 1, 1], [], []>} : vector<8x8xbf16>, vector<8x32xbf16>, vector<8x32xf32> -> vector<8x32xf32>
      %62 = arith.addf %57, %61 : vector<8x32xf32>
      %63 = vector.broadcast %21 : vector<1x32xf32> to vector<8x32xf32>
      %64 = arith.addf %62, %63 : vector<8x32xf32>
      %cst_44 = arith.constant 0.000000e+00 : f32
      %65 = vector.broadcast %cst_44 : f32 to vector<8x32xf32>
      %66 = arith.maximumf %64, %65 : vector<8x32xf32>
      %67 = arith.truncf %66 : vector<8x32xf32> to vector<8x32xbf16>
      %c0_45 = arith.constant 0 : index
      %c0_46 = arith.constant 0 : index
      %c0_47 = arith.constant 0 : index
      %68 = vector.load %arg8[%c0_45, %c0_46, %c0_47] : memref<1x32x32xbf16, #tpu.memory_space<vmem>>, vector<1x32x32xbf16>
      %69 = vector.shape_cast %68 : vector<1x32x32xbf16> to vector<32x32xbf16>
      %cst_48 = arith.constant dense<0.000000e+00> : vector<8x32xf32>
      %70 = tpu.matmul %67, %69, %cst_48 {dimension_numbers = #tpu.dot_dimension_numbers<[1], [0], [0], [1], [0, 0, 1, 1], [], []>} : vector<8x32xbf16>, vector<32x32xbf16>, vector<8x32xf32> -> vector<8x32xf32>
      %71 = vector.broadcast %23 : vector<1x32xf32> to vector<8x32xf32>
      %72 = arith.addf %70, %71 : vector<8x32xf32>
      %cst_49 = arith.constant 0.000000e+00 : f32
      %73 = vector.broadcast %cst_49 : f32 to vector<8x32xf32>
      %74 = arith.maximumf %72, %73 : vector<8x32xf32>
      %75 = vector.broadcast %25 : vector<1x32xf32> to vector<8x32xf32>
      %76 = arith.mulf %74, %75 : vector<8x32xf32>
      %cst_50 = arith.constant dense<0.000000e+00> : vector<8xf32>
      %77 = vector.multi_reduction <add>, %76, %cst_50 [1] : vector<8x32xf32> to vector<8xf32>
      %78 = vector.shape_cast %77 : vector<8xf32> to vector<1x8xf32>
      %79 = vector.broadcast %27 : vector<1x1xf32> to vector<1x8xf32>
      %80 = arith.addf %78, %79 : vector<1x8xf32>
      %c0_51 = arith.constant 0 : index
      %c0_52 = arith.constant 0 : index
      %c0_53 = arith.constant 0 : index
      %81 = vector.load %arg10[%c0_51, %c0_52, %c0_53] : memref<1x1x8xf32, #tpu.memory_space<vmem>>, vector<1x1x8xf32>
      %82 = vector.shape_cast %81 : vector<1x1x8xf32> to vector<1x8xf32>
      %83 = vector.shape_cast %80 : vector<1x8xf32> to vector<1x1x8xf32>
      tpu.vector_store %arg10[%c0_51, %c0_52, %c0_53], %83 {strides = array<i32>} : memref<1x1x8xf32, #tpu.memory_space<vmem>>, vector<1x1x8xf32>,
    } else {
    }
    return
  }
  func.func @transform_0(%arg0: i32, %arg1: i32, %arg2: i32) -> (i32, i32, i32) {
    %c0_i32 = arith.constant 0 : i32
    return %arg0, %arg1, %arg2 : i32, i32, i32
  }
  func.func @transform_1(%arg0: i32, %arg1: i32, %arg2: i32) -> (i32, i32) {
    %c0_i32 = arith.constant 0 : i32
    %c0_i32_0 = arith.constant 0 : i32
    return %arg1, %c0_i32 : i32, i32
  }
  func.func @transform_2(%arg0: i32, %arg1: i32, %arg2: i32) -> (i32, i32, i32) {
    %c0_i32 = arith.constant 0 : i32
    %c0_i32_0 = arith.constant 0 : i32
    return %arg0, %arg2, %c0_i32 : i32, i32, i32
  }
  func.func @transform_3(%arg0: i32, %arg1: i32, %arg2: i32) -> (i32, i32, i32) {
    %c0_i32 = arith.constant 0 : i32
    %c0_i32_0 = arith.constant 0 : i32
    %c0_i32_1 = arith.constant 0 : i32
    return %arg0, %c0_i32, %c0_i32_0 : i32, i32, i32
  }
  func.func @transform_4(%arg0: i32, %arg1: i32, %arg2: i32) -> (i32, i32, i32) {
    %c0_i32 = arith.constant 0 : i32
    %c0_i32_0 = arith.constant 0 : i32
    %c0_i32_1 = arith.constant 0 : i32
    return %arg0, %c0_i32, %c0_i32_0 : i32, i32, i32
  }
  func.func @transform_5(%arg0: i32, %arg1: i32, %arg2: i32) -> (i32, i32, i32) {
    %c0_i32 = arith.constant 0 : i32
    %c0_i32_0 = arith.constant 0 : i32
    %c0_i32_1 = arith.constant 0 : i32
    return %arg0, %c0_i32, %c0_i32_0 : i32, i32, i32
  }
  func.func @transform_6(%arg0: i32, %arg1: i32, %arg2: i32) -> (i32, i32, i32) {
    %c0_i32 = arith.constant 0 : i32
    %c0_i32_0 = arith.constant 0 : i32
    %c0_i32_1 = arith.constant 0 : i32
    return %arg0, %c0_i32, %c0_i32_0 : i32, i32, i32
  }
  func.func @transform_7(%arg0: i32, %arg1: i32, %arg2: i32) -> (i32, i32, i32) {
    %c0_i32 = arith.constant 0 : i32
    %c0_i32_0 = arith.constant 0 : i32
    return %arg0, %c0_i32, %arg1 : i32, i32, i32
  }
}

module attributes {stable_mosaic.version = 11 : i64} {
  func.func @_gpcritic_kernel(%arg0: i32, %arg1: i32, %arg2: i32, %arg3: memref<1x8x128xbf16, #tpu.memory_space<vmem>>, %arg4: memref<8x8xbf16, #tpu.memory_space<vmem>>, %arg5: memref<1x128x64xbf16, #tpu.memory_space<vmem>>, %arg6: memref<1x64x32xbf16, #tpu.memory_space<vmem>>, %arg7: memref<1x8x32xbf16, #tpu.memory_space<vmem>>, %arg8: memref<1x32x32xbf16, #tpu.memory_space<vmem>>, %arg9: memref<1x7x64xf32, #tpu.memory_space<vmem>>, %arg10: memref<1x1x8xf32, #tpu.memory_space<vmem>>, %arg11: memref<8x64xf32, #tpu.memory_space<vmem>>) attributes {dimension_semantics = [#tpu.dimension_semantics<parallel>, #tpu.dimension_semantics<parallel>, #tpu.dimension_semantics<arbitrary>], iteration_bounds = array<i64: 2, 1, 1>, scalar_prefetch = 0 : i64, scratch_operands = 1 : i64, tpu.core_type = #tpu.core_type<tc>, window_params = [{transform_indices = @transform_0, window_bounds = array<i64: 1, 8, 128>}, {transform_indices = @transform_1, window_bounds = array<i64: 8, 8>}, {transform_indices = @transform_2, window_bounds = array<i64: 1, 128, 64>}, {transform_indices = @transform_3, window_bounds = array<i64: 1, 64, 32>}, {transform_indices = @transform_4, window_bounds = array<i64: 1, 8, 32>}, {transform_indices = @transform_5, window_bounds = array<i64: 1, 32, 32>}, {transform_indices = @transform_6, window_bounds = array<i64: 1, 7, 64>}, {transform_indices = @transform_7, window_bounds = array<i64: 1, 1, 8>}]} {
    %c0_i32 = arith.constant 0 : i32
    %0 = arith.cmpi eq, %arg2, %c0_i32 : i32
    %1 = arith.extui %0 : i1 to i32
    %c0_i32_0 = arith.constant 0 : i32
    %2 = arith.cmpi ne, %1, %c0_i32_0 : i32
    scf.if %2 {
      %cst_12 = arith.constant 0.000000e+00 : f32
      %14 = vector.broadcast %cst_12 : f32 to vector<8x64xf32>
      %c0_13 = arith.constant 0 : index
      %c0_14 = arith.constant 0 : index
      %15 = vector.load %arg11[%c0_13, %c0_14] : memref<8x64xf32, #tpu.memory_space<vmem>>, vector<8x64xf32>
      tpu.vector_store %arg11[%c0_13, %c0_14], %14 {strides = array<i32>} : memref<8x64xf32, #tpu.memory_space<vmem>>, vector<8x64xf32>,
    } else {
    }
    %c0 = arith.constant 0 : index
    %c0_1 = arith.constant 0 : index
    %3 = vector.load %arg11[%c0, %c0_1] : memref<8x64xf32, #tpu.memory_space<vmem>>, vector<8x64xf32>
    %c0_2 = arith.constant 0 : index
    %c0_3 = arith.constant 0 : index
    %c0_4 = arith.constant 0 : index
    %4 = vector.load %arg3[%c0_2, %c0_3, %c0_4] : memref<1x8x128xbf16, #tpu.memory_space<vmem>>, vector<1x8x128xbf16>
    %5 = vector.shape_cast %4 : vector<1x8x128xbf16> to vector<8x128xbf16>
    %c0_5 = arith.constant 0 : index
    %c0_6 = arith.constant 0 : index
    %c0_7 = arith.constant 0 : index
    %6 = vector.load %arg5[%c0_5, %c0_6, %c0_7] : memref<1x128x64xbf16, #tpu.memory_space<vmem>>, vector<1x128x64xbf16>
    %7 = vector.shape_cast %6 : vector<1x128x64xbf16> to vector<128x64xbf16>
    %cst = arith.constant dense<0.000000e+00> : vector<8x64xf32>
    %8 = tpu.matmul %5, %7, %cst {dimension_numbers = #tpu.dot_dimension_numbers<[1], [0], [0], [1], [0, 0, 1, 1], [], []>} : vector<8x128xbf16>, vector<128x64xbf16>, vector<8x64xf32> -> vector<8x64xf32>
    %9 = arith.addf %3, %8 : vector<8x64xf32>
    %c0_8 = arith.constant 0 : index
    %c0_9 = arith.constant 0 : index
    %10 = vector.load %arg11[%c0_8, %c0_9] : memref<8x64xf32, #tpu.memory_space<vmem>>, vector<8x64xf32>
    tpu.vector_store %arg11[%c0_8, %c0_9], %9 {strides = array<i32>} : memref<8x64xf32, #tpu.memory_space<vmem>>, vector<8x64xf32>,
    %c0_i32_10 = arith.constant 0 : i32
    %11 = arith.cmpi eq, %arg2, %c0_i32_10 : i32
    %12 = arith.extui %11 : i1 to i32
    %c0_i32_11 = arith.constant 0 : i32
    %13 = arith.cmpi ne, %12, %c0_i32_11 : i32
    scf.if %13 {
      %c0_12 = arith.constant 0 : index
      %c0_13 = arith.constant 0 : index
      %c0_14 = arith.constant 0 : index
      %14 = vector.load %arg9[%c0_12, %c0_13, %c0_14] : memref<1x7x64xf32, #tpu.memory_space<vmem>>, vector<1x1x64xf32>
      %15 = vector.shape_cast %14 : vector<1x1x64xf32> to vector<1x64xf32>
      %c0_15 = arith.constant 0 : index
      %c1 = arith.constant 1 : index
      %c0_16 = arith.constant 0 : index
      %16 = vector.load %arg9[%c0_15, %c1, %c0_16] : memref<1x7x64xf32, #tpu.memory_space<vmem>>, vector<1x1x64xf32>
      %17 = vector.shape_cast %16 : vector<1x1x64xf32> to vector<1x64xf32>
      %c0_17 = arith.constant 0 : index
      %c2 = arith.constant 2 : index
      %c0_18 = arith.constant 0 : index
      %18 = vector.load %arg9[%c0_17, %c2, %c0_18] : memref<1x7x64xf32, #tpu.memory_space<vmem>>, vector<1x1x64xf32>
      %19 = vector.shape_cast %18 : vector<1x1x64xf32> to vector<1x64xf32>
      %c0_19 = arith.constant 0 : index
      %c3 = arith.constant 3 : index
      %c0_20 = arith.constant 0 : index
      %20 = vector.load %arg9[%c0_19, %c3, %c0_20] : memref<1x7x64xf32, #tpu.memory_space<vmem>>, vector<1x1x32xf32>
      %21 = vector.shape_cast %20 : vector<1x1x32xf32> to vector<1x32xf32>
      %c0_21 = arith.constant 0 : index
      %c4 = arith.constant 4 : index
      %c0_22 = arith.constant 0 : index
      %22 = vector.load %arg9[%c0_21, %c4, %c0_22] : memref<1x7x64xf32, #tpu.memory_space<vmem>>, vector<1x1x32xf32>
      %23 = vector.shape_cast %22 : vector<1x1x32xf32> to vector<1x32xf32>
      %c0_23 = arith.constant 0 : index
      %c5 = arith.constant 5 : index
      %c0_24 = arith.constant 0 : index
      %24 = vector.load %arg9[%c0_23, %c5, %c0_24] : memref<1x7x64xf32, #tpu.memory_space<vmem>>, vector<1x1x32xf32>
      %25 = vector.shape_cast %24 : vector<1x1x32xf32> to vector<1x32xf32>
      %c0_25 = arith.constant 0 : index
      %c6 = arith.constant 6 : index
      %c0_26 = arith.constant 0 : index
      %26 = vector.load %arg9[%c0_25, %c6, %c0_26] : memref<1x7x64xf32, #tpu.memory_space<vmem>>, vector<1x1x1xf32>
      %27 = vector.shape_cast %26 : vector<1x1x1xf32> to vector<1x1xf32>
      %c0_27 = arith.constant 0 : index
      %c0_28 = arith.constant 0 : index
      %28 = vector.load %arg11[%c0_27, %c0_28] : memref<8x64xf32, #tpu.memory_space<vmem>>, vector<8x64xf32>
      %29 = vector.broadcast %15 : vector<1x64xf32> to vector<8x64xf32>
      %30 = arith.addf %28, %29 : vector<8x64xf32>
      %cst_29 = arith.constant dense<0.000000e+00> : vector<8xf32>
      %31 = vector.multi_reduction <add>, %30, %cst_29 [1] : vector<8x64xf32> to vector<8xf32>
      %32 = vector.shape_cast %31 : vector<8xf32> to vector<8x1xf32>
      %cst_30 = arith.constant 6.400000e+01 : f32
      %33 = vector.broadcast %cst_30 : f32 to vector<8x1xf32>
      %34 = arith.divf %32, %33 : vector<8x1xf32>
      %35 = vector.broadcast %34 : vector<8x1xf32> to vector<8x64xf32>
      %36 = arith.subf %30, %35 : vector<8x64xf32>
      %37 = arith.mulf %36, %36 : vector<8x64xf32>
      %cst_31 = arith.constant dense<0.000000e+00> : vector<8xf32>
      %38 = vector.multi_reduction <add>, %37, %cst_31 [1] : vector<8x64xf32> to vector<8xf32>
      %39 = vector.shape_cast %38 : vector<8xf32> to vector<8x1xf32>
      %cst_32 = arith.constant 6.400000e+01 : f32
      %40 = vector.broadcast %cst_32 : f32 to vector<8x1xf32>
      %41 = arith.divf %39, %40 : vector<8x1xf32>
      %42 = vector.broadcast %34 : vector<8x1xf32> to vector<8x64xf32>
      %43 = arith.subf %30, %42 : vector<8x64xf32>
      %cst_33 = arith.constant 9.99999974E-6 : f32
      %44 = vector.broadcast %cst_33 : f32 to vector<8x1xf32>
      %45 = arith.addf %41, %44 : vector<8x1xf32>
      %46 = math.rsqrt %45 : vector<8x1xf32>
      %47 = vector.broadcast %46 : vector<8x1xf32> to vector<8x64xf32>
      %48 = arith.mulf %43, %47 : vector<8x64xf32>
      %49 = vector.broadcast %17 : vector<1x64xf32> to vector<8x64xf32>
      %50 = arith.mulf %48, %49 : vector<8x64xf32>
      %51 = vector.broadcast %19 : vector<1x64xf32> to vector<8x64xf32>
      %52 = arith.addf %50, %51 : vector<8x64xf32>
      %53 = math.tanh %52 : vector<8x64xf32>
      %54 = arith.truncf %53 : vector<8x64xf32> to vector<8x64xbf16>
      %c0_34 = arith.constant 0 : index
      %c0_35 = arith.constant 0 : index
      %c0_36 = arith.constant 0 : index
      %55 = vector.load %arg6[%c0_34, %c0_35, %c0_36] : memref<1x64x32xbf16, #tpu.memory_space<vmem>>, vector<1x64x32xbf16>
      %56 = vector.shape_cast %55 : vector<1x64x32xbf16> to vector<64x32xbf16>
      %cst_37 = arith.constant dense<0.000000e+00> : vector<8x32xf32>
      %57 = tpu.matmul %54, %56, %cst_37 {dimension_numbers = #tpu.dot_dimension_numbers<[1], [0], [0], [1], [0, 0, 1, 1], [], []>} : vector<8x64xbf16>, vector<64x32xbf16>, vector<8x32xf32> -> vector<8x32xf32>
      %c0_38 = arith.constant 0 : index
      %c0_39 = arith.constant 0 : index
      %58 = vector.load %arg4[%c0_38, %c0_39] : memref<8x8xbf16, #tpu.memory_space<vmem>>, vector<8x8xbf16>
      %c0_40 = arith.constant 0 : index
      %c0_41 = arith.constant 0 : index
      %c0_42 = arith.constant 0 : index
      %59 = vector.load %arg7[%c0_40, %c0_41, %c0_42] : memref<1x8x32xbf16, #tpu.memory_space<vmem>>, vector<1x8x32xbf16>
      %60 = vector.shape_cast %59 : vector<1x8x32xbf16> to vector<8x32xbf16>
      %cst_43 = arith.constant dense<0.000000e+00> : vector<8x32xf32>
      %61 = tpu.matmul %58, %60, %cst_43 {dimension_numbers = #tpu.dot_dimension_numbers<[1], [0], [0], [1], [0, 0, 1, 1], [], []>} : vector<8x8xbf16>, vector<8x32xbf16>, vector<8x32xf32> -> vector<8x32xf32>
      %62 = arith.addf %57, %61 : vector<8x32xf32>
      %63 = vector.broadcast %21 : vector<1x32xf32> to vector<8x32xf32>
      %64 = arith.addf %62, %63 : vector<8x32xf32>
      %cst_44 = arith.constant 0.000000e+00 : f32
      %65 = vector.broadcast %cst_44 : f32 to vector<8x32xf32>
      %66 = arith.maximumf %64, %65 : vector<8x32xf32>
      %67 = arith.truncf %66 : vector<8x32xf32> to vector<8x32xbf16>
      %c0_45 = arith.constant 0 : index
      %c0_46 = arith.constant 0 : index
      %c0_47 = arith.constant 0 : index
      %68 = vector.load %arg8[%c0_45, %c0_46, %c0_47] : memref<1x32x32xbf16, #tpu.memory_space<vmem>>, vector<1x32x32xbf16>
      %69 = vector.shape_cast %68 : vector<1x32x32xbf16> to vector<32x32xbf16>
      %cst_48 = arith.constant dense<0.000000e+00> : vector<8x32xf32>
      %70 = tpu.matmul %67, %69, %cst_48 {dimension_numbers = #tpu.dot_dimension_numbers<[1], [0], [0], [1], [0, 0, 1, 1], [], []>} : vector<8x32xbf16>, vector<32x32xbf16>, vector<8x32xf32> -> vector<8x32xf32>
      %71 = vector.broadcast %23 : vector<1x32xf32> to vector<8x32xf32>
      %72 = arith.addf %70, %71 : vector<8x32xf32>
      %cst_49 = arith.constant 0.000000e+00 : f32
      %73 = vector.broadcast %cst_49 : f32 to vector<8x32xf32>
      %74 = arith.maximumf %72, %73 : vector<8x32xf32>
      %75 = vector.broadcast %25 : vector<1x32xf32> to vector<8x32xf32>
      %76 = arith.mulf %74, %75 : vector<8x32xf32>
      %cst_50 = arith.constant dense<0.000000e+00> : vector<8xf32>
      %77 = vector.multi_reduction <add>, %76, %cst_50 [1] : vector<8x32xf32> to vector<8xf32>
      %78 = vector.shape_cast %77 : vector<8xf32> to vector<1x8xf32>
      %79 = vector.broadcast %27 : vector<1x1xf32> to vector<1x8xf32>
      %80 = arith.addf %78, %79 : vector<1x8xf32>
      %c0_51 = arith.constant 0 : index
      %c0_52 = arith.constant 0 : index
      %c0_53 = arith.constant 0 : index
      %81 = vector.load %arg10[%c0_51, %c0_52, %c0_53] : memref<1x1x8xf32, #tpu.memory_space<vmem>>, vector<1x1x8xf32>
      %82 = vector.shape_cast %81 : vector<1x1x8xf32> to vector<1x8xf32>
      %83 = vector.shape_cast %80 : vector<1x8xf32> to vector<1x1x8xf32>
      tpu.vector_store %arg10[%c0_51, %c0_52, %c0_53], %83 {strides = array<i32>} : memref<1x1x8xf32, #tpu.memory_space<vmem>>, vector<1x1x8xf32>,
    } else {
    }
    return
  }
  func.func @transform_0(%arg0: i32, %arg1: i32, %arg2: i32) -> (i32, i32, i32) {
    %c0_i32 = arith.constant 0 : i32
    return %arg0, %arg1, %arg2 : i32, i32, i32
  }
  func.func @transform_1(%arg0: i32, %arg1: i32, %arg2: i32) -> (i32, i32) {
    %c0_i32 = arith.constant 0 : i32
    %c0_i32_0 = arith.constant 0 : i32
    return %arg1, %c0_i32 : i32, i32
  }
  func.func @transform_2(%arg0: i32, %arg1: i32, %arg2: i32) -> (i32, i32, i32) {
    %c0_i32 = arith.constant 0 : i32
    %c0_i32_0 = arith.constant 0 : i32
    return %arg0, %arg2, %c0_i32 : i32, i32, i32
  }
  func.func @transform_3(%arg0: i32, %arg1: i32, %arg2: i32) -> (i32, i32, i32) {
    %c0_i32 = arith.constant 0 : i32
    %c0_i32_0 = arith.constant 0 : i32
    %c0_i32_1 = arith.constant 0 : i32
    return %arg0, %c0_i32, %c0_i32_0 : i32, i32, i32
  }
  func.func @transform_4(%arg0: i32, %arg1: i32, %arg2: i32) -> (i32, i32, i32) {
    %c0_i32 = arith.constant 0 : i32
    %c0_i32_0 = arith.constant 0 : i32
    %c0_i32_1 = arith.constant 0 : i32
    return %arg0, %c0_i32, %c0_i32_0 : i32, i32, i32
  }
  func.func @transform_5(%arg0: i32, %arg1: i32, %arg2: i32) -> (i32, i32, i32) {
    %c0_i32 = arith.constant 0 : i32
    %c0_i32_0 = arith.constant 0 : i32
    %c0_i32_1 = arith.constant 0 : i32
    return %arg0, %c0_i32, %c0_i32_0 : i32, i32, i32
  }
  func.func @transform_6(%arg0: i32, %arg1: i32, %arg2: i32) -> (i32, i32, i32) {
    %c0_i32 = arith.constant 0 : i32
    %c0_i32_0 = arith.constant 0 : i32
    %c0_i32_1 = arith.constant 0 : i32
    return %arg0, %c0_i32, %c0_i32_0 : i32, i32, i32
  }
  func.func @transform_7(%arg0: i32, %arg1: i32, %arg2: i32) -> (i32, i32, i32) {
    %c0_i32 = arith.constant 0 : i32
    %c0_i32_0 = arith.constant 0 : i32
    return %arg0, %c0_i32, %arg1 : i32, i32, i32
  }
}

</mosaic_0001>

<llo_original>
// kernel: tpu_custom_call.1
$region0: #{tpu_custom_call.1}
  #allocation0 [shape = 'u32[]', space=smem, size = 0x4, offset = 0x4, fixed_abs, tag = 'smem constant byte address 0x4 - core index']
  #allocation1 [shape = 'u32[144,128]{1,0:T(1,128)}', space=vmem, size = 0x12000, scoped, tag = 'internal scratch']
  #allocation2 [shape = 'f32[8,64]{1,0:T(8,128)}', space=vmem, size = 0x1000, scoped, tag = 'scratch operand']
  %s0 = inlined_call_operand.vmem [shape: bf16[2,8,128], index: 0, kind: input, shape index: {}]
  %s1 = inlined_call_operand.vmem [shape: bf16[8,8], index: 1, kind: input, shape index: {}]
  %s2 = inlined_call_operand.vmem [shape: bf16[2,128,64], index: 2, kind: input, shape index: {}]
  %s3 = inlined_call_operand.vmem [shape: bf16[2,64,32], index: 3, kind: input, shape index: {}]
  %s4 = inlined_call_operand.vmem [shape: bf16[2,8,32], index: 4, kind: input, shape index: {}]
  %s5 = inlined_call_operand.vmem [shape: bf16[2,32,32], index: 5, kind: input, shape index: {}]
  %s6 = inlined_call_operand.vmem [shape: f32[2,7,64], index: 6, kind: input, shape index: {}]
  %s7 = inlined_call_operand.hbm [shape: f32[2,1,8], index: 7, kind: output, shape index: {}]
  %s8 = sld [smem:[#allocation0]]
  $region69: #{tpu_custom_call.1} parent=0
    _
  %s10 = ssub.s32 1, %s8
  %s11 = scalar_select 0, %s10, %s8
  $region1: #{tpu_custom_call.1} parent=0
    #allocation3 [shape = 'u8[1024]{0}', space=vmem, size = 0x400, scoped, tag = 'output window, operand 0']
    #allocation4 [shape = 's32[2]{0}', space=sflag, size = 0x8, scoped, tag = 'scoped memory for tpu_custom_call.1']
    %12 = vsyncpa [#allocation4], 0
    %s13 = scalar_lea.sflag [#allocation4], 1
    %14 = vsyncpa %s13, 0
    loop: start=0, step=1, limit=4
    $region2: #{tpu_custom_call.1} parent=1 // loop_pre_header
      _
    $region3: #{tpu_custom_call.1} parent=1 // loop_header
      %s16 = sphi 0, %s20
      %p17 = scmp.ge.s32.totalorder %s16, 4
      %s23 = sphi 0, %s42
      %s24 = sphi 0, %s38
      %s25 = sphi 0, %s34
      %s26 = sphi 0, %s23
      %s27 = sphi 0, %s24
      %s28 = sphi 0, %s25
      %s29 = sphi 0, %s26
      %s30 = sphi 0, %s27
      %s31 = sphi 0, %s28
      %s49 = sphi 0, %s51
      %s52 = sphi 0, %s49
      %s53 = sphi 0, %s52
      %s69 = sphi 0, %s53
      %s75 = sphi 0, %s77
      %s78 = sphi 0, %s75
      %s79 = sphi 0, %s78
      %s95 = sphi 0, %s79
      %s103 = sphi 0, %s105
      %s106 = sphi 0, %s103
      %s107 = sphi 0, %s106
      %s123 = sphi 0, %s107
      %s129 = sphi 0, %s131
      %s132 = sphi 0, %s129
      %s133 = sphi 0, %s132
      %s149 = sphi 0, %s133
      %s155 = sphi 0, %s157
      %s158 = sphi 0, %s155
      %s159 = sphi 0, %s158
      %s175 = sphi 0, %s159
      %s181 = sphi 0, %s183
      %s184 = sphi 0, %s181
      %s185 = sphi 0, %s184
      %s201 = sphi 0, %s185
      %s207 = sphi 0, %s209
      %s210 = sphi 0, %s207
      %s211 = sphi 0, %s210
      %s227 = sphi 0, %s211
      %s235 = sphi 0, %s237
      %s238 = sphi 0, %s235
      %s239 = sphi 0, %s238
      %s255 = sphi 0, %s239
    $region4: #{tpu_custom_call.1} parent=1 // loop_header_branch
      %19 = sbr.rel (%p17) target = $region8
    $region5: #{tpu_custom_call.1} parent=1 // loop_body
      %s21 = ssub.s32 %s16, 1
      %s22 = ssub.s32 %s16, 2
      %s32 = sadd.s32 1, %s25
      %p33 = scmp.ge.s32.totalorder %s32, 1
      %s34 = scalar_select %p33, 0, %s32
      %s35 = sadd.s32 1, %s24
      %s36 = scalar_select %p33, %s35, %s24
      %p37 = scmp.ge.s32.totalorder %s36, 1
      %s38 = scalar_select %p37, 0, %s36
      %s39 = sadd.s32 1, %s23
      %s40 = scalar_select %p37, %s39, %s23
      %p41 = scmp.ge.s32.totalorder %s40, 2
      %s42 = scalar_select %p41, 0, %s40
      %s43 = ssub.s32 %s23, %s42
      %s44 = ssub.s32 %s24, %s38
      %s45 = sor.u32 %s43, %s44
      %s46 = ssub.s32 %s25, %s34
      %s47 = sor.u32 %s45, %s46
      %p48 = scmp.eq.s32.totalorder %s47, 0
      %s50 = sadd.s32 %s49, 1
      %s51 = scalar_select %p48, %s49, %s50
      %p54 = pneg %p48
      %p55 = scmp.eq.s32.totalorder %s16, 1
      %p56 = por %p54, %p55
      %p57 = scmp.ne.s32.totalorder %s49, %s52
      %p58 = scmp.eq.s32.totalorder %s16, 0
      %p59 = por %p57, %p58
      %p60 = scmp.ne.s32.totalorder %s49, %s52
      %p61 = scmp.eq.s32.totalorder %s21, 1
      %p62 = por %p60, %p61
      %p63 = scmp.ne.s32.totalorder %s52, %s53
      %p64 = scmp.eq.s32.totalorder %s21, 0
      %p65 = por %p63, %p64
      %p66 = scmp.ne.s32.totalorder %s52, %s53
      %p67 = scmp.eq.s32.totalorder %s22, 1
      %p68 = por %p66, %p67
      %p70 = scmp.ne.s32.totalorder %s53, %s69
      %p71 = scmp.eq.s32.totalorder %s22, 0
      %p72 = por %p70, %p71
      %s73 = ssub.s32 %s24, %s38
      %p74 = scmp.eq.s32.totalorder %s73, 0
      %s76 = sadd.s32 %s75, 1
      %s77 = scalar_select %p74, %s75, %s76
      %p80 = pneg %p74
      %p81 = scmp.eq.s32.totalorder %s16, 1
      %p82 = por %p80, %p81
      %p83 = scmp.ne.s32.totalorder %s75, %s78
      %p84 = scmp.eq.s32.totalorder %s16, 0
      %p85 = por %p83, %p84
      %p86 = scmp.ne.s32.totalorder %s75, %s78
      %p87 = scmp.eq.s32.totalorder %s21, 1
      %p88 = por %p86, %p87
      %p89 = scmp.ne.s32.totalorder %s78, %s79
      %p90 = scmp.eq.s32.totalorder %s21, 0
      %p91 = por %p89, %p90
      %p92 = scmp.ne.s32.totalorder %s78, %s79
      %p93 = scmp.eq.s32.totalorder %s22, 1
      %p94 = por %p92, %p93
      %p96 = scmp.ne.s32.totalorder %s79, %s95
      %p97 = scmp.eq.s32.totalorder %s22, 0
      %p98 = por %p96, %p97
      %s99 = ssub.s32 %s23, %s42
      %s100 = ssub.s32 %s25, %s34
      %s101 = sor.u32 %s99, %s100
      %p102 = scmp.eq.s32.totalorder %s101, 0
      %s104 = sadd.s32 %s103, 1
      %s105 = scalar_select %p102, %s103, %s104
      %p108 = pneg %p102
      %p109 = scmp.eq.s32.totalorder %s16, 1
      %p110 = por %p108, %p109
      %p111 = scmp.ne.s32.totalorder %s103, %s106
      %p112 = scmp.eq.s32.totalorder %s16, 0
      %p113 = por %p111, %p112
      %p114 = scmp.ne.s32.totalorder %s103, %s106
      %p115 = scmp.eq.s32.totalorder %s21, 1
      %p116 = por %p114, %p115
      %p117 = scmp.ne.s32.totalorder %s106, %s107
      %p118 = scmp.eq.s32.totalorder %s21, 0
      %p119 = por %p117, %p118
      %p120 = scmp.ne.s32.totalorder %s106, %s107
      %p121 = scmp.eq.s32.totalorder %s22, 1
      %p122 = por %p120, %p121
      %p124 = scmp.ne.s32.totalorder %s107, %s123
      %p125 = scmp.eq.s32.totalorder %s22, 0
      %p126 = por %p124, %p125
      %s127 = ssub.s32 %s23, %s42
      %p128 = scmp.eq.s32.totalorder %s127, 0
      %s130 = sadd.s32 %s129, 1
      %s131 = scalar_select %p128, %s129, %s130
      %p134 = pneg %p128
      %p135 = scmp.eq.s32.totalorder %s16, 1
      %p136 = por %p134, %p135
      %p137 = scmp.ne.s32.totalorder %s129, %s132
      %p138 = scmp.eq.s32.totalorder %s16, 0
      %p139 = por %p137, %p138
      %p140 = scmp.ne.s32.totalorder %s129, %s132
      %p141 = scmp.eq.s32.totalorder %s21, 1
      %p142 = por %p140, %p141
      %p143 = scmp.ne.s32.totalorder %s132, %s133
      %p144 = scmp.eq.s32.totalorder %s21, 0
      %p145 = por %p143, %p144
      %p146 = scmp.ne.s32.totalorder %s132, %s133
      %p147 = scmp.eq.s32.totalorder %s22, 1
      %p148 = por %p146, %p147
      %p150 = scmp.ne.s32.totalorder %s133, %s149
      %p151 = scmp.eq.s32.totalorder %s22, 0
      %p152 = por %p150, %p151
      %s153 = ssub.s32 %s23, %s42
      %p154 = scmp.eq.s32.totalorder %s153, 0
      %s156 = sadd.s32 %s155, 1
      %s157 = scalar_select %p154, %s155, %s156
      %p160 = pneg %p154
      %p161 = scmp.eq.s32.totalorder %s16, 1
      %p162 = por %p160, %p161
      %p163 = scmp.ne.s32.totalorder %s155, %s158
      %p164 = scmp.eq.s32.totalorder %s16, 0
      %p165 = por %p163, %p164
      %p166 = scmp.ne.s32.totalorder %s155, %s158
      %p167 = scmp.eq.s32.totalorder %s21, 1
      %p168 = por %p166, %p167
      %p169 = scmp.ne.s32.totalorder %s158, %s159
      %p170 = scmp.eq.s32.totalorder %s21, 0
      %p171 = por %p169, %p170
      %p172 = scmp.ne.s32.totalorder %s158, %s159
      %p173 = scmp.eq.s32.totalorder %s22, 1
      %p174 = por %p172, %p173
      %p176 = scmp.ne.s32.totalorder %s159, %s175
      %p177 = scmp.eq.s32.totalorder %s22, 0
      %p178 = por %p176, %p177
      %s179 = ssub.s32 %s23, %s42
      %p180 = scmp.eq.s32.totalorder %s179, 0
      %s182 = sadd.s32 %s181, 1
      %s183 = scalar_select %p180, %s181, %s182
      %p186 = pneg %p180
      %p187 = scmp.eq.s32.totalorder %s16, 1
      %p188 = por %p186, %p187
      %p189 = scmp.ne.s32.totalorder %s181, %s184
      %p190 = scmp.eq.s32.totalorder %s16, 0
      %p191 = por %p189, %p190
      %p192 = scmp.ne.s32.totalorder %s181, %s184
      %p193 = scmp.eq.s32.totalorder %s21, 1
      %p194 = por %p192, %p193
      %p195 = scmp.ne.s32.totalorder %s184, %s185
      %p196 = scmp.eq.s32.totalorder %s21, 0
      %p197 = por %p195, %p196
      %p198 = scmp.ne.s32.totalorder %s184, %s185
      %p199 = scmp.eq.s32.totalorder %s22, 1
      %p200 = por %p198, %p199
      %p202 = scmp.ne.s32.totalorder %s185, %s201
      %p203 = scmp.eq.s32.totalorder %s22, 0
      %p204 = por %p202, %p203
      %s205 = ssub.s32 %s23, %s42
      %p206 = scmp.eq.s32.totalorder %s205, 0
      %s208 = sadd.s32 %s207, 1
      %s209 = scalar_select %p206, %s207, %s208
      %p212 = pneg %p206
      %p213 = scmp.eq.s32.totalorder %s16, 1
      %p214 = por %p212, %p213
      %p215 = scmp.ne.s32.totalorder %s207, %s210
      %p216 = scmp.eq.s32.totalorder %s16, 0
      %p217 = por %p215, %p216
      %p218 = scmp.ne.s32.totalorder %s207, %s210
      %p219 = scmp.eq.s32.totalorder %s21, 1
      %p220 = por %p218, %p219
      %p221 = scmp.ne.s32.totalorder %s210, %s211
      %p222 = scmp.eq.s32.totalorder %s21, 0
      %p223 = por %p221, %p222
      %p224 = scmp.ne.s32.totalorder %s210, %s211
      %p225 = scmp.eq.s32.totalorder %s22, 1
      %p226 = por %p224, %p225
      %p228 = scmp.ne.s32.totalorder %s211, %s227
      %p229 = scmp.eq.s32.totalorder %s22, 0
      %p230 = por %p228, %p229
      %s231 = ssub.s32 %s23, %s42
      %s232 = ssub.s32 %s24, %s38
      %s233 = sor.u32 %s231, %s232
      %p234 = scmp.eq.s32.totalorder %s233, 0
      %s236 = sadd.s32 %s235, 1
      %s237 = scalar_select %p234, %s235, %s236
      %p240 = pneg %p234
      %p241 = scmp.eq.s32.totalorder %s16, 1
      %p242 = por %p240, %p241
      %p243 = scmp.ne.s32.totalorder %s235, %s238
      %p244 = scmp.eq.s32.totalorder %s16, 0
      %p245 = por %p243, %p244
      %p246 = scmp.ne.s32.totalorder %s235, %s238
      %p247 = scmp.eq.s32.totalorder %s21, 1
      %p248 = por %p246, %p247
      %p249 = scmp.ne.s32.totalorder %s238, %s239
      %p250 = scmp.eq.s32.totalorder %s21, 0
      %p251 = por %p249, %p250
      %p252 = scmp.ne.s32.totalorder %s238, %s239
      %p253 = scmp.eq.s32.totalorder %s22, 1
      %p254 = por %p252, %p253
      %p256 = scmp.ne.s32.totalorder %s239, %s255
      %p257 = scmp.eq.s32.totalorder %s22, 0
      %p258 = por %p256, %p257
      %p259 = scmp.le.s32.totalorder 1, %s16
      %p260 = scmp.lt.s32.totalorder %s16, 3
      %p261 = pnand %p259, %p260
      %p262 = pneg %p261
      // Predicated region
      $region9: #{tpu_custom_call.1} parent=5 // pred_check
        _
      $region10: #{tpu_custom_call.1} parent=5 // pred_check_branch
        %264 = sbr.rel (%p261) target = $region12
      $region11: #{tpu_custom_call.1} parent=5 // pred_region
        %s265 = ssub.s32 %s16, 1
        // Predicated region
        $region13: #{tpu_custom_call.1} parent=11 // pred_check
          %p266 = pneg %p91
        $region14: #{tpu_custom_call.1} parent=11 // pred_check_branch
          %268 = sbr.rel (%p266) target = $region16
        $region15: #{tpu_custom_call.1} parent=11 // pred_region
          %p269 = scmp.lt.s32.totalorder %s27, 0
          %s270 = scalar_select %p269, %s27, 0
          %s271 = smul.addr %s270, 4
          %s272 = scalar_lea.vmem %s1, %s271
        $region16: #{tpu_custom_call.1} parent=11 // pred_fallthru
          _
        // Predicated region
        $region17: #{tpu_custom_call.1} parent=11 // pred_check
          %p273 = pneg %p145
        $region18: #{tpu_custom_call.1} parent=11 // pred_check_branch
          %275 = sbr.rel (%p273) target = $region20
        $region19: #{tpu_custom_call.1} parent=11 // pred_region
          %p276 = scmp.lt.s32.totalorder %s26, 1
          %s277 = scalar_select %p276, %s26, 1
          %s278 = smul.addr %s277, 8
          %s279 = smul.addr %s278, 4
          %s280 = scalar_lea.vmem %s3, %s279
        $region20: #{tpu_custom_call.1} parent=11 // pred_fallthru
          _
        // Predicated region
        $region21: #{tpu_custom_call.1} parent=11 // pred_check
          %p281 = pneg %p171
        $region22: #{tpu_custom_call.1} parent=11 // pred_check_branch
          %283 = sbr.rel (%p281) target = $region24
        $region23: #{tpu_custom_call.1} parent=11 // pred_region
          %p284 = scmp.lt.s32.totalorder %s26, 1
          %s285 = scalar_select %p284, %s26, 1
          %s286 = smul.addr %s285, 4
          %s287 = scalar_lea.vmem %s4, %s286
        $region24: #{tpu_custom_call.1} parent=11 // pred_fallthru
          _
        // Predicated region
        $region25: #{tpu_custom_call.1} parent=11 // pred_check
          %p288 = pneg %p197
        $region26: #{tpu_custom_call.1} parent=11 // pred_check_branch
          %290 = sbr.rel (%p288) target = $region28
        $region27: #{tpu_custom_call.1} parent=11 // pred_region
          %p291 = scmp.lt.s32.totalorder %s26, 1
          %s292 = scalar_select %p291, %s26, 1
          %s293 = smul.addr %s292, 4
          %s294 = smul.addr %s293, 4
          %s295 = scalar_lea.vmem %s5, %s294
        $region28: #{tpu_custom_call.1} parent=11 // pred_fallthru
          _
        // Predicated region
        $region29: #{tpu_custom_call.1} parent=11 // pred_check
          %p296 = pneg %p223
        $region30: #{tpu_custom_call.1} parent=11 // pred_check_branch
          %298 = sbr.rel (%p296) target = $region32
        $region31: #{tpu_custom_call.1} parent=11 // pred_region
          %p299 = scmp.lt.s32.totalorder %s26, 1
          %s300 = scalar_select %p299, %s26, 1
          %s301 = smul.addr %s300, 8
          %s302 = scalar_lea.vmem %s6, %s301
        $region32: #{tpu_custom_call.1} parent=11 // pred_fallthru
          _
      $region12: #{tpu_custom_call.1} parent=5 // pred_fallthru
        _
      %p303 = scmp.lt.s32.totalorder %s16, 2
      // Predicated region
      $region33: #{tpu_custom_call.1} parent=5 // pred_check
        %p304 = pneg %p303
      $region34: #{tpu_custom_call.1} parent=5 // pred_check_branch
        %306 = sbr.rel (%p304) target = $region36
      $region35: #{tpu_custom_call.1} parent=5 // pred_region
        // Predicated region
        $region37: #{tpu_custom_call.1} parent=35 // pred_check
          %p307 = pneg %p59
        $region38: #{tpu_custom_call.1} parent=35 // pred_check_branch
          %309 = sbr.rel (%p307) target = $region40
        $region39: #{tpu_custom_call.1} parent=35 // pred_region
          %p310 = scmp.lt.s32.totalorder %s23, 1
          %s311 = scalar_select %p310, %s23, 1
          %p312 = scmp.lt.s32.totalorder %s24, 0
          %s313 = scalar_select %p312, %s24, 0
          %p314 = scmp.lt.s32.totalorder %s25, 0
          %s315 = scalar_select %p314, %s25, 0
          %s316 = sadd.s32 %s315, %s313
          %s317 = sadd.s32 %s316, %s311
          %s318 = smul.addr %s317, 4
          %s319 = scalar_lea.vmem %s0, %s318
        $region40: #{tpu_custom_call.1} parent=35 // pred_fallthru
          _
        // Predicated region
        $region41: #{tpu_custom_call.1} parent=35 // pred_check
          %p320 = pneg %p113
        $region42: #{tpu_custom_call.1} parent=35 // pred_check_branch
          %322 = sbr.rel (%p320) target = $region44
        $region43: #{tpu_custom_call.1} parent=35 // pred_region
          %s323 = smul.u32 16, %s25
          %p324 = scmp.lt.s32.totalorder %s23, 1
          %s325 = scalar_select %p324, %s23, 1
          %p326 = scmp.lt.s32.totalorder %s323, 15
          %s327 = scalar_select %p326, %s323, 15
          %s328 = smul.addr %s325, 16
          %s329 = sadd.s32 %s327, %s328
          %s330 = smul.addr %s329, 4
          %s331 = scalar_lea.vmem %s2, %s330
          %s332 = smul.u32 16, %s25
        $region44: #{tpu_custom_call.1} parent=35 // pred_fallthru
          _
      $region36: #{tpu_custom_call.1} parent=5 // pred_fallthru
        _
      %p333 = scmp.le.s32.totalorder 1, %s16
      %p334 = scmp.lt.s32.totalorder %s16, 3
      %p335 = pnand %p333, %p334
      %p336 = pneg %p335
      // Predicated region
      $region45: #{tpu_custom_call.1} parent=5 // pred_check
        _
      $region46: #{tpu_custom_call.1} parent=5 // pred_check_branch
        %338 = sbr.rel (%p335) target = $region48
      $region47: #{tpu_custom_call.1} parent=5 // pred_region
        %s339 = ssub.s32 %s16, 1
        %p340 = scmp.lt.s32.totalorder %s26, 1
        %s341 = scalar_select %p340, %s26, 1
        %p342 = scmp.lt.s32.totalorder %s27, 0
        %s343 = scalar_select %p342, %s27, 0
        %p344 = scmp.lt.s32.totalorder %s28, 0
        %s345 = scalar_select %p344, %s28, 0
        %s346 = sadd.s32 %s345, %s343
        %s347 = sadd.s32 %s346, %s341
        %s348 = smul.addr %s347, 4
        %s349 = scalar_lea.vmem %s0, %s348
        %p350 = pneg %p65
        %p351 = pneg %p62
        %p352 = scmp.lt.s32.totalorder %s27, 0
        %s353 = scalar_select %p352, %s27, 0
        %s354 = smul.addr %s353, 4
        %s355 = scalar_lea.vmem %s1, %s354
        %p356 = pneg %p91
        %p357 = pneg %p88
        %s358 = smul.u32 16, %s28
        %p359 = scmp.lt.s32.totalorder %s26, 1
        %s360 = scalar_select %p359, %s26, 1
        %p361 = scmp.lt.s32.totalorder %s358, 15
        %s362 = scalar_select %p361, %s358, 15
        %s363 = smul.addr %s360, 16
        %s364 = sadd.s32 %s362, %s363
        %s365 = smul.addr %s364, 4
        %s366 = scalar_lea.vmem %s2, %s365
        %p367 = pneg %p119
        %p368 = pneg %p116
        %p369 = scmp.lt.s32.totalorder %s26, 1
        %s370 = scalar_select %p369, %s26, 1
        %s371 = smul.addr %s370, 8
        %s372 = smul.addr %s371, 4
        %s373 = scalar_lea.vmem %s3, %s372
        %p374 = pneg %p145
        %p375 = pneg %p142
        %p376 = scmp.lt.s32.totalorder %s26, 1
        %s377 = scalar_select %p376, %s26, 1
        %s378 = smul.addr %s377, 4
        %s379 = scalar_lea.vmem %s4, %s378
        %p380 = pneg %p171
        %p381 = pneg %p168
        %p382 = scmp.lt.s32.totalorder %s26, 1
        %s383 = scalar_select %p382, %s26, 1
        %s384 = smul.addr %s383, 4
        %s385 = smul.addr %s384, 4
        %s386 = scalar_lea.vmem %s5, %s385
        %p387 = pneg %p197
        %p388 = pneg %p194
        %p389 = scmp.lt.s32.totalorder %s26, 1
        %s390 = scalar_select %p389, %s26, 1
        %s391 = smul.addr %s390, 8
        %s392 = scalar_lea.vmem %s6, %s391
        %p393 = pneg %p223
        %p394 = pneg %p220
        %p395 = pneg %p251
        %p396 = pneg %p248
        %s397 = sand.u32 %s238, 1
        %s398 = scalar_lea.sflag [#allocation4], %s397
        %s399 = sand.u32 %s238, 1
        %s400 = scalar_lea.vmem [#allocation3], %s399
        %p401 = scmp.lt.s32.totalorder %s26, 1
        %s402 = scalar_select %p401, %s26, 1
        %p403 = scmp.lt.s32.totalorder %s27, 0
        %s404 = scalar_select %p403, %s27, 0
        %p405 = scmp.lt.s32.totalorder %s28, 0
        %s406 = scalar_select %p405, %s28, 0
        %s407 = sadd.s32 %s406, %s404
        %s408 = sadd.s32 %s407, %s402
        %s409 = smul.addr %s408, 4
        %s410 = scalar_lea.vmem %s0, %s409
        %p411 = scmp.lt.s32.totalorder %s27, 0
        %s412 = scalar_select %p411, %s27, 0
        %s413 = smul.addr %s412, 4
        %s414 = scalar_lea.vmem %s1, %s413
        %s415 = smul.u32 16, %s28
        %p416 = scmp.lt.s32.totalorder %s26, 1
        %s417 = scalar_select %p416, %s26, 1
        %p418 = scmp.lt.s32.totalorder %s415, 15
        %s419 = scalar_select %p418, %s415, 15
        %s420 = smul.addr %s417, 16
        %s421 = sadd.s32 %s419, %s420
        %s422 = smul.addr %s421, 4
        %s423 = scalar_lea.vmem %s2, %s422
        %s424 = smul.u32 16, %s28
        %p425 = scmp.lt.s32.totalorder %s26, 1
        %s426 = scalar_select %p425, %s26, 1
        %s427 = smul.addr %s426, 8
        %s428 = smul.addr %s427, 4
        %s429 = scalar_lea.vmem %s3, %s428
        %p430 = scmp.lt.s32.totalorder %s26, 1
        %s431 = scalar_select %p430, %s26, 1
        %s432 = smul.addr %s431, 4
        %s433 = scalar_lea.vmem %s4, %s432
        %p434 = scmp.lt.s32.totalorder %s26, 1
        %s435 = scalar_select %p434, %s26, 1
        %s436 = smul.addr %s435, 4
        %s437 = smul.addr %s436, 4
        %s438 = scalar_lea.vmem %s5, %s437
        %p439 = scmp.lt.s32.totalorder %s26, 1
        %s440 = scalar_select %p439, %s26, 1
        %s441 = smul.addr %s440, 8
        %s442 = scalar_lea.vmem %s6, %s441
        %p444 = scmp.eq.s32.totalorder %s28, 0
        // Predicated region
        $region49: #{tpu_custom_call.1} parent=47 // pred_check
          %p445 = pneg %p444
        $region50: #{tpu_custom_call.1} parent=47 // pred_check_branch
          %447 = sbr.rel (%p445) target = $region52
        $region51: #{tpu_custom_call.1} parent=47 // pred_region
          %vm448 = vcmask 523264
          %449 = vst.msk [vmem:[#allocation2] sm:$0xff] %vm448, 0.0
        $region52: #{tpu_custom_call.1} parent=47 // pred_fallthru
          _
        %v450 = vld [vmem:[#allocation2] sm:$0xff]
        %v451 = vld [vmem:[%s410] sm:$0xf]
        %v452 = vld [vmem:[%s423] sm:$0xf]
        %v453 = vld [vmem:[%s423 + $0x4] sm:$0xf]
        %v454 = vld [vmem:[%s423 + $0x8] sm:$0xf]
        %v455 = vld [vmem:[%s423 + $0xc] sm:$0xf]
        %v456 = vld [vmem:[%s423 + $0x10] sm:$0xf]
        %v457 = vld [vmem:[%s423 + $0x14] sm:$0xf]
        %v458 = vld [vmem:[%s423 + $0x18] sm:$0xf]
        %v459 = vld [vmem:[%s423 + $0x1c] sm:$0xf]
        %v460 = vld [vmem:[%s423 + $0x20] sm:$0xf]
        %v461 = vld [vmem:[%s423 + $0x24] sm:$0xf]
        %v462 = vld [vmem:[%s423 + $0x28] sm:$0xf]
        %v463 = vld [vmem:[%s423 + $0x2c] sm:$0xf]
        %v464 = vld [vmem:[%s423 + $0x30] sm:$0xf]
        %v465 = vld [vmem:[%s423 + $0x34] sm:$0xf]
        %v466 = vld [vmem:[%s423 + $0x38] sm:$0xf]
        %v467 = vld [vmem:[%s423 + $0x3c] sm:$0xf]
        %v484 = vunpack.c.l.b16 %v452
        %v485 = vunpack.c.l.b16 %v453
        %v486 = vunpack.c.l.b16 %v454
        %v487 = vunpack.c.l.b16 %v455
        %v488 = vunpack.c.l.b16 %v456
        %v489 = vunpack.c.l.b16 %v457
        %v490 = vunpack.c.l.b16 %v458
        %v491 = vunpack.c.l.b16 %v459
        %v492 = vunpack.c.l.b16 %v460
        %v493 = vunpack.c.l.b16 %v461
        %v494 = vunpack.c.l.b16 %v462
        %v495 = vunpack.c.l.b16 %v463
        %v496 = vunpack.c.l.b16 %v464
        %v497 = vunpack.c.l.b16 %v465
        %v498 = vunpack.c.l.b16 %v466
        %v499 = vunpack.c.l.b16 %v467
        %v500 = vpack.c.b16 %v485, %v484
        %v501 = vpack.c.b16 %v487, %v486
        %v502 = vpack.c.b16 %v489, %v488
        %v503 = vpack.c.b16 %v491, %v490
        %v504 = vpack.c.b16 %v493, %v492
        %v505 = vpack.c.b16 %v495, %v494
        %v506 = vpack.c.b16 %v497, %v496
        %v507 = vpack.c.b16 %v499, %v498
        %516 = vmatprep.subr.bf16.mxu0 0
        %517 = vmatpush1.bf16.msra.mxu0 %v500
        %518 = vmatprep.subr.bf16.mxu0 0
        %519 = vmatpush1.bf16.msra.mxu0 %v501
        %520 = vmatprep.subr.bf16.mxu0 0
        %521 = vmatpush1.bf16.msra.mxu0 %v502
        %522 = vmatprep.subr.bf16.mxu0 0
        %523 = vmatpush1.bf16.msra.mxu0 %v503
        %524 = vmatprep.subr.bf16.mxu0 0
        %525 = vmatpush1.bf16.msra.mxu0 %v504
        %526 = vmatprep.subr.bf16.mxu0 0
        %527 = vmatpush1.bf16.msra.mxu0 %v505
        %528 = vmatprep.subr.bf16.mxu0 0
        %529 = vmatpush1.bf16.msra.mxu0 %v506
        %530 = vmatprep.subr.bf16.mxu0 0
        %531 = vmatpush1.bf16.msra.mxu0 %v507
        %532 = vmatprep.subr.bf16.mxu0 0
        %533 = vmatpush1.bf16.msra.mxu0 0
        %534 = vmatprep.subr.bf16.mxu0 0
        %535 = vmatpush1.bf16.msra.mxu0 0
        %536 = vmatprep.subr.bf16.mxu0 0
        %537 = vmatpush1.bf16.msra.mxu0 0
        %538 = vmatprep.subr.bf16.mxu0 0
        %539 = vmatpush1.bf16.msra.mxu0 0
        %540 = vmatprep.subr.bf16.mxu0 0
        %541 = vmatpush1.bf16.msra.mxu0 0
        %542 = vmatprep.subr.bf16.mxu0 0
        %543 = vmatpush1.bf16.msra.mxu0 0
        %544 = vmatprep.subr.bf16.mxu0 0
        %545 = vmatpush1.bf16.msra.mxu0 0
        %546 = vmatprep.subr.bf16.mxu0 0
        %547 = vmatpush1.bf16.msra.mxu0 0
        %548 = vmatprep.mubr.bf16.mxu0 0
        %549 = vmatmul.mubr.bf16.gmra.mrb[0].mxu0 %v451
        %v550 = vpop.f32.mrb[0].mxu0
        %v551 = vadd.f32 0.0, %v550
        %v552 = vpop.f32.mrb[0].mxu0
        %v553 = vpop.f32.mrb[0].mxu0
        %v554 = vpop.f32.mrb[0].mxu0
        %555 = vdwg.mxu0
        %v556 = vadd.f32 %v450, %v551
        %vm557 = vcmask 523264
        %558 = vst.msk [vmem:[#allocation2] sm:$0xff] %vm557, %v556
        // Predicated region
        $region53: #{tpu_custom_call.1} parent=47 // pred_check
          %p559 = pneg %p444
        $region54: #{tpu_custom_call.1} parent=47 // pred_check_branch
          %561 = sbr.rel (%p559) target = $region56
        $region55: #{tpu_custom_call.1} parent=47 // pred_region
          %v562 = vld [vmem:[%s442] sm:$0x1]
          %v563 = vld [vmem:[%s442 + $0x1] sm:$0x1]
          %v564 = vld [vmem:[%s442 + $0x2] sm:$0x1]
          %v565 = vld [vmem:[%s442 + $0x3] sm:$0x1]
          %v566 = vld [vmem:[%s442 + $0x4] sm:$0x1]
          %v567 = vld [vmem:[%s442 + $0x5] sm:$0x1]
          %v568 = vld [vmem:[%s442 + $0x6] sm:$0x1]
          %v569 = vld [vmem:[#allocation2] sm:$0xff]
          %v570 = vlaneseq
          %v571 = vshrl.u32 %v570, 7
          %v572 = vsub.s32 0, %v571
          %v573 = vrot.slane %v562, %v572
          %v574 = vadd.f32 %v569, %v573
          %v575 = vsel %vm557, %v574, 0.0
          %576 = vadd.xlane.f32.xlu0 %v575
          %v577 = vpop.xlane.xlu0 %576
          %v578 = vrcp.pop 64.0
          %v579 = vmul.f32 %v577, %v578
          %v580 = vsub.f32 %v574, %v579
          %v581 = vmul.f32 %v580, %v580
          %v582 = vsel %vm557, %v581, 0.0
          %583 = vadd.xlane.f32.xlu0 %v582
          %v584 = vpop.xlane.xlu0 %583
          %v585 = vmul.f32 %v584, %v578
          %v586 = vadd.f32 %v585, 1e-05
          %v587 = vrsqrt.pop %v586
          %v588 = vmul.f32 %v580, %v587
          %v589 = vlaneseq
          %v590 = vshrl.u32 %v589, 7
          %v591 = vsub.s32 0, %v590
          %v592 = vrot.slane %v563, %v591
          %v593 = vmul.f32 %v588, %v592
          %v594 = vlaneseq
          %v595 = vshrl.u32 %v594, 7
          %v596 = vsub.s32 0, %v595
          %v597 = vrot.slane %v564, %v596
          %v598 = vadd.f32 %v593, %v597
          %v599 = vtanh.pop %v598
          %v600 = vpack.c.bf16 %v599, %v599
          %v601 = vld [vmem:[%s429] sm:$0xf]
          %v602 = vld [vmem:[%s429 + $0x4] sm:$0xf]
          %v603 = vld [vmem:[%s429 + $0x8] sm:$0xf]
          %v604 = vld [vmem:[%s429 + $0xc] sm:$0xf]
          %v605 = vld [vmem:[%s429 + $0x10] sm:$0xf]
          %v606 = vld [vmem:[%s429 + $0x14] sm:$0xf]
          %v607 = vld [vmem:[%s429 + $0x18] sm:$0xf]
          %v608 = vld [vmem:[%s429 + $0x1c] sm:$0xf]
          %v609 = vld [vmem:[%s414] sm:$0xf]
          %v610 = vld [vmem:[%s433] sm:$0xf]
          %vm611 = vcmask 64512
          %v613 = vsel %vm611, %v609, 0
          %vm615 = vcmask 1043456
          %v617 = vsel %vm615, %v610, 0
          %619 = vmatprep.subr.bf16.mxu0 0
          %620 = vmatpush1.bf16.msra.mxu0 %v617
          %621 = vmatprep.subr.bf16.mxu0 0
          %622 = vmatpush1.bf16.msra.mxu0 0
          %623 = vmatprep.subr.bf16.mxu0 0
          %624 = vmatpush1.bf16.msra.mxu0 0
          %625 = vmatprep.subr.bf16.mxu0 0
          %626 = vmatpush1.bf16.msra.mxu0 0
          %627 = vmatprep.subr.bf16.mxu0 0
          %628 = vmatpush1.bf16.msra.mxu0 0
          %629 = vmatprep.subr.bf16.mxu0 0
          %630 = vmatpush1.bf16.msra.mxu0 0
          %631 = vmatprep.subr.bf16.mxu0 0
          %632 = vmatpush1.bf16.msra.mxu0 0
          %633 = vmatprep.subr.bf16.mxu0 0
          %634 = vmatpush1.bf16.msra.mxu0 0
          %635 = vmatprep.subr.bf16.mxu0 0
          %636 = vmatpush1.bf16.msra.mxu0 0
          %637 = vmatprep.subr.bf16.mxu0 0
          %638 = vmatpush1.bf16.msra.mxu0 0
          %639 = vmatprep.subr.bf16.mxu0 0
          %640 = vmatpush1.bf16.msra.mxu0 0
          %641 = vmatprep.subr.bf16.mxu0 0
          %642 = vmatpush1.bf16.msra.mxu0 0
          %643 = vmatprep.subr.bf16.mxu0 0
          %644 = vmatpush1.bf16.msra.mxu0 0
          %645 = vmatprep.subr.bf16.mxu0 0
          %646 = vmatpush1.bf16.msra.mxu0 0
          %647 = vmatprep.subr.bf16.mxu0 0
          %648 = vmatpush1.bf16.msra.mxu0 0
          %649 = vmatprep.subr.bf16.mxu0 0
          %650 = vmatpush1.bf16.msra.mxu0 0
          %651 = vmatprep.mubr.bf16.mxu0 0
          %652 = vmatmul.mubr.bf16.gmra.mrb[0].mxu0 %v613
          %v653 = vpop.f32.mrb[0].mxu0
          %v654 = vadd.f32 0.0, %v653
          %v655 = vpop.f32.mrb[0].mxu0
          %v656 = vpop.f32.mrb[0].mxu0
          %v657 = vpop.f32.mrb[0].mxu0
          %658 = vdwg.mxu0
          %v667 = vunpack.c.l.b16 %v601
          %v668 = vunpack.c.l.b16 %v602
          %v669 = vunpack.c.l.b16 %v603
          %v670 = vunpack.c.l.b16 %v604
          %v671 = vunpack.c.l.b16 %v605
          %v672 = vunpack.c.l.b16 %v606
          %v673 = vunpack.c.l.b16 %v607
          %v674 = vunpack.c.l.b16 %v608
          %v675 = vpack.c.b16 %v668, %v667
          %v676 = vpack.c.b16 %v670, %v669
          %v677 = vpack.c.b16 %v672, %v671
          %v678 = vpack.c.b16 %v674, %v673
          %v684 = vsel %vm557, %v600, 0
          %686 = vmatprep.subr.bf16.mxu0 0
          %687 = vmatpush1.bf16.msra.mxu0 %v675
          %688 = vmatprep.subr.bf16.mxu0 0
          %689 = vmatpush1.bf16.msra.mxu0 %v676
          %690 = vmatprep.subr.bf16.mxu0 0
          %691 = vmatpush1.bf16.msra.mxu0 %v677
          %692 = vmatprep.subr.bf16.mxu0 0
          %693 = vmatpush1.bf16.msra.mxu0 %v678
          %694 = vmatprep.subr.bf16.mxu0 0
          %695 = vmatpush1.bf16.msra.mxu0 0
          %696 = vmatprep.subr.bf16.mxu0 0
          %697 = vmatpush1.bf16.msra.mxu0 0
          %698 = vmatprep.subr.bf16.mxu0 0
          %699 = vmatpush1.bf16.msra.mxu0 0
          %700 = vmatprep.subr.bf16.mxu0 0
          %701 = vmatpush1.bf16.msra.mxu0 0
          %702 = vmatprep.subr.bf16.mxu0 0
          %703 = vmatpush1.bf16.msra.mxu0 0
          %704 = vmatprep.subr.bf16.mxu0 0
          %705 = vmatpush1.bf16.msra.mxu0 0
          %706 = vmatprep.subr.bf16.mxu0 0
          %707 = vmatpush1.bf16.msra.mxu0 0
          %708 = vmatprep.subr.bf16.mxu0 0
          %709 = vmatpush1.bf16.msra.mxu0 0
          %710 = vmatprep.subr.bf16.mxu0 0
          %711 = vmatpush1.bf16.msra.mxu0 0
          %712 = vmatprep.subr.bf16.mxu0 0
          %713 = vmatpush1.bf16.msra.mxu0 0
          %714 = vmatprep.subr.bf16.mxu0 0
          %715 = vmatpush1.bf16.msra.mxu0 0
          %716 = vmatprep.subr.bf16.mxu0 0
          %717 = vmatpush1.bf16.msra.mxu0 0
          %718 = vmatprep.mubr.bf16.mxu0 0
          %719 = vmatmul.mubr.bf16.gmra.mrb[0].mxu0 %v684
          %v720 = vpop.f32.mrb[0].mxu0
          %v721 = vadd.f32 %v654, %v720
          %v722 = vpop.f32.mrb[0].mxu0
          %v723 = vpop.f32.mrb[0].mxu0
          %v724 = vpop.f32.mrb[0].mxu0
          %725 = vdwg.mxu0
          %v726 = vlaneseq
          %v727 = vshrl.u32 %v726, 7
          %v728 = vsub.s32 0, %v727
          %v729 = vrot.slane %v565, %v728
          %v730 = vadd.f32 %v721, %v729
          %v731 = vmax.f32 %v730, 0.0
          %v732 = vpack.c.bf16 %v731, %v731
          %v733 = vld [vmem:[%s438] sm:$0xf]
          %v734 = vld [vmem:[%s438 + $0x4] sm:$0xf]
          %v735 = vld [vmem:[%s438 + $0x8] sm:$0xf]
          %v736 = vld [vmem:[%s438 + $0xc] sm:$0xf]
          %v737 = vlaneseq
          %v738 = vshrl.u32 %v737, 7
          %v739 = vsub.s32 0, %v738
          %v740 = vrot.slane %v566, %v739
          %v745 = vunpack.c.l.b16 %v733
          %v746 = vunpack.c.l.b16 %v734
          %v747 = vunpack.c.l.b16 %v735
          %v748 = vunpack.c.l.b16 %v736
          %v749 = vpack.c.b16 %v746, %v745
          %v750 = vpack.c.b16 %v748, %v747
          %vm753 = vcmask 261120
          %v755 = vsel %vm753, %v732, 0
          %757 = vmatprep.subr.bf16.mxu0 0
          %758 = vmatpush1.bf16.msra.mxu0 %v749
          %759 = vmatprep.subr.bf16.mxu0 0
          %760 = vmatpush1.bf16.msra.mxu0 %v750
          %761 = vmatprep.subr.bf16.mxu0 0
          %762 = vmatpush1.bf16.msra.mxu0 0
          %763 = vmatprep.subr.bf16.mxu0 0
          %764 = vmatpush1.bf16.msra.mxu0 0
          %765 = vmatprep.subr.bf16.mxu0 0
          %766 = vmatpush1.bf16.msra.mxu0 0
          %767 = vmatprep.subr.bf16.mxu0 0
          %768 = vmatpush1.bf16.msra.mxu0 0
          %769 = vmatprep.subr.bf16.mxu0 0
          %770 = vmatpush1.bf16.msra.mxu0 0
          %771 = vmatprep.subr.bf16.mxu0 0
          %772 = vmatpush1.bf16.msra.mxu0 0
          %773 = vmatprep.subr.bf16.mxu0 0
          %774 = vmatpush1.bf16.msra.mxu0 0
          %775 = vmatprep.subr.bf16.mxu0 0
          %776 = vmatpush1.bf16.msra.mxu0 0
          %777 = vmatprep.subr.bf16.mxu0 0
          %778 = vmatpush1.bf16.msra.mxu0 0
          %779 = vmatprep.subr.bf16.mxu0 0
          %780 = vmatpush1.bf16.msra.mxu0 0
          %781 = vmatprep.subr.bf16.mxu0 0
          %782 = vmatpush1.bf16.msra.mxu0 0
          %783 = vmatprep.subr.bf16.mxu0 0
          %784 = vmatpush1.bf16.msra.mxu0 0
          %785 = vmatprep.subr.bf16.mxu0 0
          %786 = vmatpush1.bf16.msra.mxu0 0
          %787 = vmatprep.subr.bf16.mxu0 0
          %788 = vmatpush1.bf16.msra.mxu0 0
          %789 = vmatprep.mubr.bf16.mxu0 0
          %790 = vmatmul.mubr.bf16.gmra.mrb[0].mxu0 %v755
          %v791 = vpop.f32.mrb[0].mxu0
          %v792 = vadd.f32 %v740, %v791
          %v793 = vpop.f32.mrb[0].mxu0
          %v794 = vpop.f32.mrb[0].mxu0
          %v795 = vpop.f32.mrb[0].mxu0
          %796 = vdwg.mxu0
          %v797 = vmax.f32 %v792, 0.0
          %v798 = vlaneseq
          %v799 = vshrl.u32 %v798, 7
          %v800 = vsub.s32 0, %v799
          %v801 = vrot.slane %v567, %v800
          %v802 = vmul.f32 %v797, %v801
          %v803 = vsel %vm753, %v802, 0.0
          %804 = vadd.xlane.f32.xlu0 %v803
          %v805 = vpop.xlane.xlu0 %804
          %807 = vset.pattern.permute.xlu0 0
          %808 = vperm.xlu0 %807, %v568
          %v809 = vpop.permute.xlu0 %808
          %v810 = vlaneseq
          %v811 = vshrl.u32 %v810, 7
          %v812 = vsub.s32 0, %v811
          %v813 = vrot.slane %v809, %v812
          %v815 = vadd.f32 %v805, %v813
          %817 = vset.pattern.permute.xlu0 0
          %818 = vperm.xlu0 %817, %v815
          %v819 = vpop.permute.xlu0 %818
          %v820 = vlaneseq
          %v821 = vand.u32 %v820, 127
          %v822 = vlaneseq
          %v823 = vshrl.u32 %v822, 7
          %v824 = vsub.s32 %v821, %v823
          %v825 = vrot.slane %v819, %v824
          %vm827 = vcmask 57344
          %828 = vst.msk [vmem:[%s400] sm:$0x1] %vm827, %v825
        $region56: #{tpu_custom_call.1} parent=47 // pred_fallthru
          _
        %s829 = sand.u32 %s238, 1
        %s830 = scalar_lea.sflag [#allocation4], %s829
        %s831 = sand.u32 %s238, 1
        %s832 = scalar_lea.vmem [#allocation3], %s831
        // Predicated region
        $region57: #{tpu_custom_call.1} parent=47 // pred_check
          %p833 = pneg %p248
        $region58: #{tpu_custom_call.1} parent=47 // pred_check_branch
          %835 = sbr.rel (%p833) target = $region60
        $region59: #{tpu_custom_call.1} parent=47 // pred_region
          %s837 = ssub.s32 16, 16
          %838 = vsyncadd %s830, %s837
          %s839 = sadd.s32 %s27, %s26
          %s840 = smul.addr %s839, 16
          %s841 = scalar_lea.hbm %s7, %s840
          %s843 = sshll.u32 %s832, 4
          %s844 = int_to_ptr.vmem [resolvable:$true] %s843
          %846 = dma.vmem_to_hbm [thread:$0]  %s844, 16, %s841, %s830
        $region60: #{tpu_custom_call.1} parent=47 // pred_fallthru
          _
      $region48: #{tpu_custom_call.1} parent=5 // pred_fallthru
        _
      %p847 = scmp.le.s32.totalorder 2, %s16
      // Predicated region
      $region61: #{tpu_custom_call.1} parent=5 // pred_check
        %p848 = pneg %p847
      $region62: #{tpu_custom_call.1} parent=5 // pred_check_branch
        %850 = sbr.rel (%p848) target = $region64
      $region63: #{tpu_custom_call.1} parent=5 // pred_region
        %s851 = ssub.s32 %s16, 2
        // Predicated region
        $region65: #{tpu_custom_call.1} parent=63 // pred_check
          %p852 = pneg %p254
        $region66: #{tpu_custom_call.1} parent=63 // pred_check_branch
          %854 = sbr.rel (%p852) target = $region68
        $region67: #{tpu_custom_call.1} parent=63 // pred_region
          %s855 = sand.u32 %s239, 1
          %s856 = scalar_lea.sflag [#allocation4], %s855
          %s857 = sand.u32 %s239, 1
          %s858 = scalar_lea.vmem [#allocation3], %s857
          %859 = dma.done %s856, 16
        $region68: #{tpu_custom_call.1} parent=63 // pred_fallthru
          _
      $region64: #{tpu_custom_call.1} parent=5 // pred_fallthru
        _
    $region6: #{tpu_custom_call.1} parent=1 // loop_footer
      %s20 = sadd.s32 1, %s16
    $region7: #{tpu_custom_call.1} parent=1 // loop_footer_branch
      %15 = sbr.rel target = $region3
    $region8: #{tpu_custom_call.1} parent=1 // loop_exit
      _
    %860 = vsyncpa [#allocation4], 1
    %s861 = scalar_lea.sflag [#allocation4], 1
    %862 = vsyncpa %s861, 1

// kernel: tpu_custom_call.1
$region0: #{tpu_custom_call.1}
  #allocation0 [shape = 'u32[]', space=smem, size = 0x4, offset = 0x4, fixed_abs, tag = 'smem constant byte address 0x4 - core index']
  #allocation1 [shape = 'u32[144,128]{1,0:T(1,128)}', space=vmem, size = 0x12000, scoped, tag = 'internal scratch']
  #allocation2 [shape = 'f32[8,64]{1,0:T(8,128)}', space=vmem, size = 0x1000, scoped, tag = 'scratch operand']
  %s0 = inlined_call_operand.vmem [shape: bf16[2,8,128], index: 0, kind: input, shape index: {}]
  %s1 = inlined_call_operand.vmem [shape: bf16[8,8], index: 1, kind: input, shape index: {}]
  %s2 = inlined_call_operand.vmem [shape: bf16[2,128,64], index: 2, kind: input, shape index: {}]
  %s3 = inlined_call_operand.vmem [shape: bf16[2,64,32], index: 3, kind: input, shape index: {}]
  %s4 = inlined_call_operand.vmem [shape: bf16[2,8,32], index: 4, kind: input, shape index: {}]
  %s5 = inlined_call_operand.vmem [shape: bf16[2,32,32], index: 5, kind: input, shape index: {}]
  %s6 = inlined_call_operand.vmem [shape: f32[2,7,64], index: 6, kind: input, shape index: {}]
  %s7 = inlined_call_operand.hbm [shape: f32[2,1,8], index: 7, kind: output, shape index: {}]
  %s8 = sld [smem:[#allocation0]]
  $region69: #{tpu_custom_call.1} parent=0
    _
  %s10 = ssub.s32 1, %s8
  %s11 = scalar_select 0, %s10, %s8
  $region1: #{tpu_custom_call.1} parent=0
    #allocation3 [shape = 'u8[1024]{0}', space=vmem, size = 0x400, scoped, tag = 'output window, operand 0']
    #allocation4 [shape = 's32[2]{0}', space=sflag, size = 0x8, scoped, tag = 'scoped memory for tpu_custom_call.1']
    %12 = vsyncpa [#allocation4], 0
    %s13 = scalar_lea.sflag [#allocation4], 1
    %14 = vsyncpa %s13, 0
    loop: start=0, step=1, limit=4
    $region2: #{tpu_custom_call.1} parent=1 // loop_pre_header
      _
    $region3: #{tpu_custom_call.1} parent=1 // loop_header
      %s16 = sphi 0, %s20
      %p17 = scmp.ge.s32.totalorder %s16, 4
      %s23 = sphi 0, %s42
      %s24 = sphi 0, %s38
      %s25 = sphi 0, %s34
      %s26 = sphi 0, %s23
      %s27 = sphi 0, %s24
      %s28 = sphi 0, %s25
      %s29 = sphi 0, %s26
      %s30 = sphi 0, %s27
      %s31 = sphi 0, %s28
      %s49 = sphi 0, %s51
      %s52 = sphi 0, %s49
      %s53 = sphi 0, %s52
      %s69 = sphi 0, %s53
      %s75 = sphi 0, %s77
      %s78 = sphi 0, %s75
      %s79 = sphi 0, %s78
      %s95 = sphi 0, %s79
      %s103 = sphi 0, %s105
      %s106 = sphi 0, %s103
      %s107 = sphi 0, %s106
      %s123 = sphi 0, %s107
      %s129 = sphi 0, %s131
      %s132 = sphi 0, %s129
      %s133 = sphi 0, %s132
      %s149 = sphi 0, %s133
      %s155 = sphi 0, %s157
      %s158 = sphi 0, %s155
      %s159 = sphi 0, %s158
      %s175 = sphi 0, %s159
      %s181 = sphi 0, %s183
      %s184 = sphi 0, %s181
      %s185 = sphi 0, %s184
      %s201 = sphi 0, %s185
      %s207 = sphi 0, %s209
      %s210 = sphi 0, %s207
      %s211 = sphi 0, %s210
      %s227 = sphi 0, %s211
      %s235 = sphi 0, %s237
      %s238 = sphi 0, %s235
      %s239 = sphi 0, %s238
      %s255 = sphi 0, %s239
    $region4: #{tpu_custom_call.1} parent=1 // loop_header_branch
      %19 = sbr.rel (%p17) target = $region8
    $region5: #{tpu_custom_call.1} parent=1 // loop_body
      %s21 = ssub.s32 %s16, 1
      %s22 = ssub.s32 %s16, 2
      %s32 = sadd.s32 1, %s25
      %p33 = scmp.ge.s32.totalorder %s32, 1
      %s34 = scalar_select %p33, 0, %s32
      %s35 = sadd.s32 1, %s24
      %s36 = scalar_select %p33, %s35, %s24
      %p37 = scmp.ge.s32.totalorder %s36, 1
      %s38 = scalar_select %p37, 0, %s36
      %s39 = sadd.s32 1, %s23
      %s40 = scalar_select %p37, %s39, %s23
      %p41 = scmp.ge.s32.totalorder %s40, 2
      %s42 = scalar_select %p41, 0, %s40
      %s43 = ssub.s32 %s23, %s42
      %s44 = ssub.s32 %s24, %s38
      %s45 = sor.u32 %s43, %s44
      %s46 = ssub.s32 %s25, %s34
      %s47 = sor.u32 %s45, %s46
      %p48 = scmp.eq.s32.totalorder %s47, 0
      %s50 = sadd.s32 %s49, 1
      %s51 = scalar_select %p48, %s49, %s50
      %p54 = pneg %p48
      %p55 = scmp.eq.s32.totalorder %s16, 1
      %p56 = por %p54, %p55
      %p57 = scmp.ne.s32.totalorder %s49, %s52
      %p58 = scmp.eq.s32.totalorder %s16, 0
      %p59 = por %p57, %p58
      %p60 = scmp.ne.s32.totalorder %s49, %s52
      %p61 = scmp.eq.s32.totalorder %s21, 1
      %p62 = por %p60, %p61
      %p63 = scmp.ne.s32.totalorder %s52, %s53
      %p64 = scmp.eq.s32.totalorder %s21, 0
      %p65 = por %p63, %p64
      %p66 = scmp.ne.s32.totalorder %s52, %s53
      %p67 = scmp.eq.s32.totalorder %s22, 1
      %p68 = por %p66, %p67
      %p70 = scmp.ne.s32.totalorder %s53, %s69
      %p71 = scmp.eq.s32.totalorder %s22, 0
      %p72 = por %p70, %p71
      %s73 = ssub.s32 %s24, %s38
      %p74 = scmp.eq.s32.totalorder %s73, 0
      %s76 = sadd.s32 %s75, 1
      %s77 = scalar_select %p74, %s75, %s76
      %p80 = pneg %p74
      %p81 = scmp.eq.s32.totalorder %s16, 1
      %p82 = por %p80, %p81
      %p83 = scmp.ne.s32.totalorder %s75, %s78
      %p84 = scmp.eq.s32.totalorder %s16, 0
      %p85 = por %p83, %p84
      %p86 = scmp.ne.s32.totalorder %s75, %s78
      %p87 = scmp.eq.s32.totalorder %s21, 1
      %p88 = por %p86, %p87
      %p89 = scmp.ne.s32.totalorder %s78, %s79
      %p90 = scmp.eq.s32.totalorder %s21, 0
      %p91 = por %p89, %p90
      %p92 = scmp.ne.s32.totalorder %s78, %s79
      %p93 = scmp.eq.s32.totalorder %s22, 1
      %p94 = por %p92, %p93
      %p96 = scmp.ne.s32.totalorder %s79, %s95
      %p97 = scmp.eq.s32.totalorder %s22, 0
      %p98 = por %p96, %p97
      %s99 = ssub.s32 %s23, %s42
      %s100 = ssub.s32 %s25, %s34
      %s101 = sor.u32 %s99, %s100
      %p102 = scmp.eq.s32.totalorder %s101, 0
      %s104 = sadd.s32 %s103, 1
      %s105 = scalar_select %p102, %s103, %s104
      %p108 = pneg %p102
      %p109 = scmp.eq.s32.totalorder %s16, 1
      %p110 = por %p108, %p109
      %p111 = scmp.ne.s32.totalorder %s103, %s106
      %p112 = scmp.eq.s32.totalorder %s16, 0
      %p113 = por %p111, %p112
      %p114 = scmp.ne.s32.totalorder %s103, %s106
      %p115 = scmp.eq.s32.totalorder %s21, 1
      %p116 = por %p114, %p115
      %p117 = scmp.ne.s32.totalorder %s106, %s107
      %p118 = scmp.eq.s32.totalorder %s21, 0
      %p119 = por %p117, %p118
      %p120 = scmp.ne.s32.totalorder %s106, %s107
      %p121 = scmp.eq.s32.totalorder %s22, 1
      %p122 = por %p120, %p121
      %p124 = scmp.ne.s32.totalorder %s107, %s123
      %p125 = scmp.eq.s32.totalorder %s22, 0
      %p126 = por %p124, %p125
      %s127 = ssub.s32 %s23, %s42
      %p128 = scmp.eq.s32.totalorder %s127, 0
      %s130 = sadd.s32 %s129, 1
      %s131 = scalar_select %p128, %s129, %s130
      %p134 = pneg %p128
      %p135 = scmp.eq.s32.totalorder %s16, 1
      %p136 = por %p134, %p135
      %p137 = scmp.ne.s32.totalorder %s129, %s132
      %p138 = scmp.eq.s32.totalorder %s16, 0
      %p139 = por %p137, %p138
      %p140 = scmp.ne.s32.totalorder %s129, %s132
      %p141 = scmp.eq.s32.totalorder %s21, 1
      %p142 = por %p140, %p141
      %p143 = scmp.ne.s32.totalorder %s132, %s133
      %p144 = scmp.eq.s32.totalorder %s21, 0
      %p145 = por %p143, %p144
      %p146 = scmp.ne.s32.totalorder %s132, %s133
      %p147 = scmp.eq.s32.totalorder %s22, 1
      %p148 = por %p146, %p147
      %p150 = scmp.ne.s32.totalorder %s133, %s149
      %p151 = scmp.eq.s32.totalorder %s22, 0
      %p152 = por %p150, %p151
      %s153 = ssub.s32 %s23, %s42
      %p154 = scmp.eq.s32.totalorder %s153, 0
      %s156 = sadd.s32 %s155, 1
      %s157 = scalar_select %p154, %s155, %s156
      %p160 = pneg %p154
      %p161 = scmp.eq.s32.totalorder %s16, 1
      %p162 = por %p160, %p161
      %p163 = scmp.ne.s32.totalorder %s155, %s158
      %p164 = scmp.eq.s32.totalorder %s16, 0
      %p165 = por %p163, %p164
      %p166 = scmp.ne.s32.totalorder %s155, %s158
      %p167 = scmp.eq.s32.totalorder %s21, 1
      %p168 = por %p166, %p167
      %p169 = scmp.ne.s32.totalorder %s158, %s159
      %p170 = scmp.eq.s32.totalorder %s21, 0
      %p171 = por %p169, %p170
      %p172 = scmp.ne.s32.totalorder %s158, %s159
      %p173 = scmp.eq.s32.totalorder %s22, 1
      %p174 = por %p172, %p173
      %p176 = scmp.ne.s32.totalorder %s159, %s175
      %p177 = scmp.eq.s32.totalorder %s22, 0
      %p178 = por %p176, %p177
      %s179 = ssub.s32 %s23, %s42
      %p180 = scmp.eq.s32.totalorder %s179, 0
      %s182 = sadd.s32 %s181, 1
      %s183 = scalar_select %p180, %s181, %s182
      %p186 = pneg %p180
      %p187 = scmp.eq.s32.totalorder %s16, 1
      %p188 = por %p186, %p187
      %p189 = scmp.ne.s32.totalorder %s181, %s184
      %p190 = scmp.eq.s32.totalorder %s16, 0
      %p191 = por %p189, %p190
      %p192 = scmp.ne.s32.totalorder %s181, %s184
      %p193 = scmp.eq.s32.totalorder %s21, 1
      %p194 = por %p192, %p193
      %p195 = scmp.ne.s32.totalorder %s184, %s185
      %p196 = scmp.eq.s32.totalorder %s21, 0
      %p197 = por %p195, %p196
      %p198 = scmp.ne.s32.totalorder %s184, %s185
      %p199 = scmp.eq.s32.totalorder %s22, 1
      %p200 = por %p198, %p199
      %p202 = scmp.ne.s32.totalorder %s185, %s201
      %p203 = scmp.eq.s32.totalorder %s22, 0
      %p204 = por %p202, %p203
      %s205 = ssub.s32 %s23, %s42
      %p206 = scmp.eq.s32.totalorder %s205, 0
      %s208 = sadd.s32 %s207, 1
      %s209 = scalar_select %p206, %s207, %s208
      %p212 = pneg %p206
      %p213 = scmp.eq.s32.totalorder %s16, 1
      %p214 = por %p212, %p213
      %p215 = scmp.ne.s32.totalorder %s207, %s210
      %p216 = scmp.eq.s32.totalorder %s16, 0
      %p217 = por %p215, %p216
      %p218 = scmp.ne.s32.totalorder %s207, %s210
      %p219 = scmp.eq.s32.totalorder %s21, 1
      %p220 = por %p218, %p219
      %p221 = scmp.ne.s32.totalorder %s210, %s211
      %p222 = scmp.eq.s32.totalorder %s21, 0
      %p223 = por %p221, %p222
      %p224 = scmp.ne.s32.totalorder %s210, %s211
      %p225 = scmp.eq.s32.totalorder %s22, 1
      %p226 = por %p224, %p225
      %p228 = scmp.ne.s32.totalorder %s211, %s227
      %p229 = scmp.eq.s32.totalorder %s22, 0
      %p230 = por %p228, %p229
      %s231 = ssub.s32 %s23, %s42
      %s232 = ssub.s32 %s24, %s38
      %s233 = sor.u32 %s231, %s232
      %p234 = scmp.eq.s32.totalorder %s233, 0
      %s236 = sadd.s32 %s235, 1
      %s237 = scalar_select %p234, %s235, %s236
      %p240 = pneg %p234
      %p241 = scmp.eq.s32.totalorder %s16, 1
      %p242 = por %p240, %p241
      %p243 = scmp.ne.s32.totalorder %s235, %s238
      %p244 = scmp.eq.s32.totalorder %s16, 0
      %p245 = por %p243, %p244
      %p246 = scmp.ne.s32.totalorder %s235, %s238
      %p247 = scmp.eq.s32.totalorder %s21, 1
      %p248 = por %p246, %p247
      %p249 = scmp.ne.s32.totalorder %s238, %s239
      %p250 = scmp.eq.s32.totalorder %s21, 0
      %p251 = por %p249, %p250
      %p252 = scmp.ne.s32.totalorder %s238, %s239
      %p253 = scmp.eq.s32.totalorder %s22, 1
      %p254 = por %p252, %p253
      %p256 = scmp.ne.s32.totalorder %s239, %s255
      %p257 = scmp.eq.s32.totalorder %s22, 0
      %p258 = por %p256, %p257
      %p259 = scmp.le.s32.totalorder 1, %s16
      %p260 = scmp.lt.s32.totalorder %s16, 3
      %p261 = pnand %p259, %p260
      %p262 = pneg %p261
      // Predicated region
      $region9: #{tpu_custom_call.1} parent=5 // pred_check
        _
      $region10: #{tpu_custom_call.1} parent=5 // pred_check_branch
        %264 = sbr.rel (%p261) target = $region12
      $region11: #{tpu_custom_call.1} parent=5 // pred_region
        %s265 = ssub.s32 %s16, 1
        // Predicated region
        $region13: #{tpu_custom_call.1} parent=11 // pred_check
          %p266 = pneg %p91
        $region14: #{tpu_custom_call.1} parent=11 // pred_check_branch
          %268 = sbr.rel (%p266) target = $region16
        $region15: #{tpu_custom_call.1} parent=11 // pred_region
          %p269 = scmp.lt.s32.totalorder %s27, 0
          %s270 = scalar_select %p269, %s27, 0
          %s271 = smul.addr %s270, 4
          %s272 = scalar_lea.vmem %s1, %s271
        $region16: #{tpu_custom_call.1} parent=11 // pred_fallthru
          _
      $region12: #{tpu_custom_call.1} parent=5 // pred_fallthru
        _
      %p273 = scmp.lt.s32.totalorder %s16, 2
      // Predicated region
      $region17: #{tpu_custom_call.1} parent=5 // pred_check
        %p274 = pneg %p273
      $region18: #{tpu_custom_call.1} parent=5 // pred_check_branch
        %276 = sbr.rel (%p274) target = $region20
      $region19: #{tpu_custom_call.1} parent=5 // pred_region
        // Predicated region
        $region21: #{tpu_custom_call.1} parent=19 // pred_check
          %p277 = pneg %p59
        $region22: #{tpu_custom_call.1} parent=19 // pred_check_branch
          %279 = sbr.rel (%p277) target = $region24
        $region23: #{tpu_custom_call.1} parent=19 // pred_region
          %p280 = scmp.lt.s32.totalorder %s23, 1
          %s281 = scalar_select %p280, %s23, 1
          %p282 = scmp.lt.s32.totalorder %s24, 0
          %s283 = scalar_select %p282, %s24, 0
          %p284 = scmp.lt.s32.totalorder %s25, 0
          %s285 = scalar_select %p284, %s25, 0
          %s286 = sadd.s32 %s285, %s283
          %s287 = sadd.s32 %s286, %s281
          %s288 = smul.addr %s287, 4
          %s289 = scalar_lea.vmem %s0, %s288
        $region24: #{tpu_custom_call.1} parent=19 // pred_fallthru
          _
        // Predicated region
        $region25: #{tpu_custom_call.1} parent=19 // pred_check
          %p290 = pneg %p113
        $region26: #{tpu_custom_call.1} parent=19 // pred_check_branch
          %292 = sbr.rel (%p290) target = $region28
        $region27: #{tpu_custom_call.1} parent=19 // pred_region
          %s293 = smul.u32 16, %s25
          %p294 = scmp.lt.s32.totalorder %s23, 1
          %s295 = scalar_select %p294, %s23, 1
          %p296 = scmp.lt.s32.totalorder %s293, 15
          %s297 = scalar_select %p296, %s293, 15
          %s298 = smul.addr %s295, 16
          %s299 = sadd.s32 %s297, %s298
          %s300 = smul.addr %s299, 4
          %s301 = scalar_lea.vmem %s2, %s300
          %s302 = smul.u32 16, %s25
        $region28: #{tpu_custom_call.1} parent=19 // pred_fallthru
          _
        // Predicated region
        $region29: #{tpu_custom_call.1} parent=19 // pred_check
          %p303 = pneg %p139
        $region30: #{tpu_custom_call.1} parent=19 // pred_check_branch
          %305 = sbr.rel (%p303) target = $region32
        $region31: #{tpu_custom_call.1} parent=19 // pred_region
          %p306 = scmp.lt.s32.totalorder %s23, 1
          %s307 = scalar_select %p306, %s23, 1
          %s308 = smul.addr %s307, 8
          %s309 = smul.addr %s308, 4
          %s310 = scalar_lea.vmem %s3, %s309
        $region32: #{tpu_custom_call.1} parent=19 // pred_fallthru
          _
        // Predicated region
        $region33: #{tpu_custom_call.1} parent=19 // pred_check
          %p311 = pneg %p165
        $region34: #{tpu_custom_call.1} parent=19 // pred_check_branch
          %313 = sbr.rel (%p311) target = $region36
        $region35: #{tpu_custom_call.1} parent=19 // pred_region
          %p314 = scmp.lt.s32.totalorder %s23, 1
          %s315 = scalar_select %p314, %s23, 1
          %s316 = smul.addr %s315, 4
          %s317 = scalar_lea.vmem %s4, %s316
        $region36: #{tpu_custom_call.1} parent=19 // pred_fallthru
          _
        // Predicated region
        $region37: #{tpu_custom_call.1} parent=19 // pred_check
          %p318 = pneg %p191
        $region38: #{tpu_custom_call.1} parent=19 // pred_check_branch
          %320 = sbr.rel (%p318) target = $region40
        $region39: #{tpu_custom_call.1} parent=19 // pred_region
          %p321 = scmp.lt.s32.totalorder %s23, 1
          %s322 = scalar_select %p321, %s23, 1
          %s323 = smul.addr %s322, 4
          %s324 = smul.addr %s323, 4
          %s325 = scalar_lea.vmem %s5, %s324
        $region40: #{tpu_custom_call.1} parent=19 // pred_fallthru
          _
        // Predicated region
        $region41: #{tpu_custom_call.1} parent=19 // pred_check
          %p326 = pneg %p217
        $region42: #{tpu_custom_call.1} parent=19 // pred_check_branch
          %328 = sbr.rel (%p326) target = $region44
        $region43: #{tpu_custom_call.1} parent=19 // pred_region
          %p329 = scmp.lt.s32.totalorder %s23, 1
          %s330 = scalar_select %p329, %s23, 1
          %s331 = smul.addr %s330, 8
          %s332 = scalar_lea.vmem %s6, %s331
        $region44: #{tpu_custom_call.1} parent=19 // pred_fallthru
          _
      $region20: #{tpu_custom_call.1} parent=5 // pred_fallthru
        _
      %p333 = scmp.le.s32.totalorder 1, %s16
      %p334 = scmp.lt.s32.totalorder %s16, 3
      %p335 = pnand %p333, %p334
      %p336 = pneg %p335
      // Predicated region
      $region45: #{tpu_custom_call.1} parent=5 // pred_check
        _
      $region46: #{tpu_custom_call.1} parent=5 // pred_check_branch
        %338 = sbr.rel (%p335) target = $region48
      $region47: #{tpu_custom_call.1} parent=5 // pred_region
        %s339 = ssub.s32 %s16, 1
        %p340 = scmp.lt.s32.totalorder %s26, 1
        %s341 = scalar_select %p340, %s26, 1
        %p342 = scmp.lt.s32.totalorder %s27, 0
        %s343 = scalar_select %p342, %s27, 0
        %p344 = scmp.lt.s32.totalorder %s28, 0
        %s345 = scalar_select %p344, %s28, 0
        %s346 = sadd.s32 %s345, %s343
        %s347 = sadd.s32 %s346, %s341
        %s348 = smul.addr %s347, 4
        %s349 = scalar_lea.vmem %s0, %s348
        %p350 = pneg %p65
        %p351 = pneg %p62
        %p352 = scmp.lt.s32.totalorder %s27, 0
        %s353 = scalar_select %p352, %s27, 0
        %s354 = smul.addr %s353, 4
        %s355 = scalar_lea.vmem %s1, %s354
        %p356 = pneg %p91
        %p357 = pneg %p88
        %s358 = smul.u32 16, %s28
        %p359 = scmp.lt.s32.totalorder %s26, 1
        %s360 = scalar_select %p359, %s26, 1
        %p361 = scmp.lt.s32.totalorder %s358, 15
        %s362 = scalar_select %p361, %s358, 15
        %s363 = smul.addr %s360, 16
        %s364 = sadd.s32 %s362, %s363
        %s365 = smul.addr %s364, 4
        %s366 = scalar_lea.vmem %s2, %s365
        %p367 = pneg %p119
        %p368 = pneg %p116
        %p369 = scmp.lt.s32.totalorder %s26, 1
        %s370 = scalar_select %p369, %s26, 1
        %s371 = smul.addr %s370, 8
        %s372 = smul.addr %s371, 4
        %s373 = scalar_lea.vmem %s3, %s372
        %p374 = pneg %p145
        %p375 = pneg %p142
        %p376 = scmp.lt.s32.totalorder %s26, 1
        %s377 = scalar_select %p376, %s26, 1
        %s378 = smul.addr %s377, 4
        %s379 = scalar_lea.vmem %s4, %s378
        %p380 = pneg %p171
        %p381 = pneg %p168
        %p382 = scmp.lt.s32.totalorder %s26, 1
        %s383 = scalar_select %p382, %s26, 1
        %s384 = smul.addr %s383, 4
        %s385 = smul.addr %s384, 4
        %s386 = scalar_lea.vmem %s5, %s385
        %p387 = pneg %p197
        %p388 = pneg %p194
        %p389 = scmp.lt.s32.totalorder %s26, 1
        %s390 = scalar_select %p389, %s26, 1
        %s391 = smul.addr %s390, 8
        %s392 = scalar_lea.vmem %s6, %s391
        %p393 = pneg %p223
        %p394 = pneg %p220
        %p395 = pneg %p251
        %p396 = pneg %p248
        %s397 = sand.u32 %s238, 1
        %s398 = scalar_lea.sflag [#allocation4], %s397
        %s399 = sand.u32 %s238, 1
        %s400 = scalar_lea.vmem [#allocation3], %s399
        %p401 = scmp.lt.s32.totalorder %s26, 1
        %s402 = scalar_select %p401, %s26, 1
        %p403 = scmp.lt.s32.totalorder %s27, 0
        %s404 = scalar_select %p403, %s27, 0
        %p405 = scmp.lt.s32.totalorder %s28, 0
        %s406 = scalar_select %p405, %s28, 0
        %s407 = sadd.s32 %s406, %s404
        %s408 = sadd.s32 %s407, %s402
        %s409 = smul.addr %s408, 4
        %s410 = scalar_lea.vmem %s0, %s409
        %p411 = scmp.lt.s32.totalorder %s27, 0
        %s412 = scalar_select %p411, %s27, 0
        %s413 = smul.addr %s412, 4
        %s414 = scalar_lea.vmem %s1, %s413
        %s415 = smul.u32 16, %s28
        %p416 = scmp.lt.s32.totalorder %s26, 1
        %s417 = scalar_select %p416, %s26, 1
        %p418 = scmp.lt.s32.totalorder %s415, 15
        %s419 = scalar_select %p418, %s415, 15
        %s420 = smul.addr %s417, 16
        %s421 = sadd.s32 %s419, %s420
        %s422 = smul.addr %s421, 4
        %s423 = scalar_lea.vmem %s2, %s422
        %s424 = smul.u32 16, %s28
        %p425 = scmp.lt.s32.totalorder %s26, 1
        %s426 = scalar_select %p425, %s26, 1
        %s427 = smul.addr %s426, 8
        %s428 = smul.addr %s427, 4
        %s429 = scalar_lea.vmem %s3, %s428
        %p430 = scmp.lt.s32.totalorder %s26, 1
        %s431 = scalar_select %p430, %s26, 1
        %s432 = smul.addr %s431, 4
        %s433 = scalar_lea.vmem %s4, %s432
        %p434 = scmp.lt.s32.totalorder %s26, 1
        %s435 = scalar_select %p434, %s26, 1
        %s436 = smul.addr %s435, 4
        %s437 = smul.addr %s436, 4
        %s438 = scalar_lea.vmem %s5, %s437
        %p439 = scmp.lt.s32.totalorder %s26, 1
        %s440 = scalar_select %p439, %s26, 1
        %s441 = smul.addr %s440, 8
        %s442 = scalar_lea.vmem %s6, %s441
        %p444 = scmp.eq.s32.totalorder %s28, 0
        // Predicated region
        $region49: #{tpu_custom_call.1} parent=47 // pred_check
          %p445 = pneg %p444
        $region50: #{tpu_custom_call.1} parent=47 // pred_check_branch
          %447 = sbr.rel (%p445) target = $region52
        $region51: #{tpu_custom_call.1} parent=47 // pred_region
          %vm448 = vcmask 523264
          %449 = vst.msk [vmem:[#allocation2] sm:$0xff] %vm448, 0.0
        $region52: #{tpu_custom_call.1} parent=47 // pred_fallthru
          _
        %v450 = vld [vmem:[#allocation2] sm:$0xff]
        %v451 = vld [vmem:[%s410] sm:$0xf]
        %v452 = vld [vmem:[%s423] sm:$0xf]
        %v453 = vld [vmem:[%s423 + $0x4] sm:$0xf]
        %v454 = vld [vmem:[%s423 + $0x8] sm:$0xf]
        %v455 = vld [vmem:[%s423 + $0xc] sm:$0xf]
        %v456 = vld [vmem:[%s423 + $0x10] sm:$0xf]
        %v457 = vld [vmem:[%s423 + $0x14] sm:$0xf]
        %v458 = vld [vmem:[%s423 + $0x18] sm:$0xf]
        %v459 = vld [vmem:[%s423 + $0x1c] sm:$0xf]
        %v460 = vld [vmem:[%s423 + $0x20] sm:$0xf]
        %v461 = vld [vmem:[%s423 + $0x24] sm:$0xf]
        %v462 = vld [vmem:[%s423 + $0x28] sm:$0xf]
        %v463 = vld [vmem:[%s423 + $0x2c] sm:$0xf]
        %v464 = vld [vmem:[%s423 + $0x30] sm:$0xf]
        %v465 = vld [vmem:[%s423 + $0x34] sm:$0xf]
        %v466 = vld [vmem:[%s423 + $0x38] sm:$0xf]
        %v467 = vld [vmem:[%s423 + $0x3c] sm:$0xf]
        %v484 = vunpack.c.l.b16 %v452
        %v485 = vunpack.c.l.b16 %v453
        %v486 = vunpack.c.l.b16 %v454
        %v487 = vunpack.c.l.b16 %v455
        %v488 = vunpack.c.l.b16 %v456
        %v489 = vunpack.c.l.b16 %v457
        %v490 = vunpack.c.l.b16 %v458
        %v491 = vunpack.c.l.b16 %v459
        %v492 = vunpack.c.l.b16 %v460
        %v493 = vunpack.c.l.b16 %v461
        %v494 = vunpack.c.l.b16 %v462
        %v495 = vunpack.c.l.b16 %v463
        %v496 = vunpack.c.l.b16 %v464
        %v497 = vunpack.c.l.b16 %v465
        %v498 = vunpack.c.l.b16 %v466
        %v499 = vunpack.c.l.b16 %v467
        %v500 = vpack.c.b16 %v485, %v484
        %v501 = vpack.c.b16 %v487, %v486
        %v502 = vpack.c.b16 %v489, %v488
        %v503 = vpack.c.b16 %v491, %v490
        %v504 = vpack.c.b16 %v493, %v492
        %v505 = vpack.c.b16 %v495, %v494
        %v506 = vpack.c.b16 %v497, %v496
        %v507 = vpack.c.b16 %v499, %v498
        %516 = vmatprep.subr.bf16.mxu0 0
        %517 = vmatpush1.bf16.msra.mxu0 %v500
        %518 = vmatprep.subr.bf16.mxu0 0
        %519 = vmatpush1.bf16.msra.mxu0 %v501
        %520 = vmatprep.subr.bf16.mxu0 0
        %521 = vmatpush1.bf16.msra.mxu0 %v502
        %522 = vmatprep.subr.bf16.mxu0 0
        %523 = vmatpush1.bf16.msra.mxu0 %v503
        %524 = vmatprep.subr.bf16.mxu0 0
        %525 = vmatpush1.bf16.msra.mxu0 %v504
        %526 = vmatprep.subr.bf16.mxu0 0
        %527 = vmatpush1.bf16.msra.mxu0 %v505
        %528 = vmatprep.subr.bf16.mxu0 0
        %529 = vmatpush1.bf16.msra.mxu0 %v506
        %530 = vmatprep.subr.bf16.mxu0 0
        %531 = vmatpush1.bf16.msra.mxu0 %v507
        %532 = vmatprep.subr.bf16.mxu0 0
        %533 = vmatpush1.bf16.msra.mxu0 0
        %534 = vmatprep.subr.bf16.mxu0 0
        %535 = vmatpush1.bf16.msra.mxu0 0
        %536 = vmatprep.subr.bf16.mxu0 0
        %537 = vmatpush1.bf16.msra.mxu0 0
        %538 = vmatprep.subr.bf16.mxu0 0
        %539 = vmatpush1.bf16.msra.mxu0 0
        %540 = vmatprep.subr.bf16.mxu0 0
        %541 = vmatpush1.bf16.msra.mxu0 0
        %542 = vmatprep.subr.bf16.mxu0 0
        %543 = vmatpush1.bf16.msra.mxu0 0
        %544 = vmatprep.subr.bf16.mxu0 0
        %545 = vmatpush1.bf16.msra.mxu0 0
        %546 = vmatprep.subr.bf16.mxu0 0
        %547 = vmatpush1.bf16.msra.mxu0 0
        %548 = vmatprep.mubr.bf16.mxu0 0
        %549 = vmatmul.mubr.bf16.gmra.mrb[0].mxu0 %v451
        %v550 = vpop.f32.mrb[0].mxu0
        %v551 = vadd.f32 0.0, %v550
        %v552 = vpop.f32.mrb[0].mxu0
        %v553 = vpop.f32.mrb[0].mxu0
        %v554 = vpop.f32.mrb[0].mxu0
        %555 = vdwg.mxu0
        %v556 = vadd.f32 %v450, %v551
        %vm557 = vcmask 523264
        %558 = vst.msk [vmem:[#allocation2] sm:$0xff] %vm557, %v556
        // Predicated region
        $region53: #{tpu_custom_call.1} parent=47 // pred_check
          %p559 = pneg %p444
        $region54: #{tpu_custom_call.1} parent=47 // pred_check_branch
          %561 = sbr.rel (%p559) target = $region56
        $region55: #{tpu_custom_call.1} parent=47 // pred_region
          %v562 = vld [vmem:[%s442] sm:$0x1]
          %v563 = vld [vmem:[%s442 + $0x1] sm:$0x1]
          %v564 = vld [vmem:[%s442 + $0x2] sm:$0x1]
          %v565 = vld [vmem:[%s442 + $0x3] sm:$0x1]
          %v566 = vld [vmem:[%s442 + $0x4] sm:$0x1]
          %v567 = vld [vmem:[%s442 + $0x5] sm:$0x1]
          %v568 = vld [vmem:[%s442 + $0x6] sm:$0x1]
          %v569 = vld [vmem:[#allocation2] sm:$0xff]
          %v570 = vlaneseq
          %v571 = vshrl.u32 %v570, 7
          %v572 = vsub.s32 0, %v571
          %v573 = vrot.slane %v562, %v572
          %v574 = vadd.f32 %v569, %v573
          %v575 = vsel %vm557, %v574, 0.0
          %576 = vadd.xlane.f32.xlu0 %v575
          %v577 = vpop.xlane.xlu0 %576
          %v578 = vrcp.pop 64.0
          %v579 = vmul.f32 %v577, %v578
          %v580 = vsub.f32 %v574, %v579
          %v581 = vmul.f32 %v580, %v580
          %v582 = vsel %vm557, %v581, 0.0
          %583 = vadd.xlane.f32.xlu0 %v582
          %v584 = vpop.xlane.xlu0 %583
          %v585 = vmul.f32 %v584, %v578
          %v586 = vadd.f32 %v585, 1e-05
          %v587 = vrsqrt.pop %v586
          %v588 = vmul.f32 %v580, %v587
          %v589 = vlaneseq
          %v590 = vshrl.u32 %v589, 7
          %v591 = vsub.s32 0, %v590
          %v592 = vrot.slane %v563, %v591
          %v593 = vmul.f32 %v588, %v592
          %v594 = vlaneseq
          %v595 = vshrl.u32 %v594, 7
          %v596 = vsub.s32 0, %v595
          %v597 = vrot.slane %v564, %v596
          %v598 = vadd.f32 %v593, %v597
          %v599 = vtanh.pop %v598
          %v600 = vpack.c.bf16 %v599, %v599
          %v601 = vld [vmem:[%s429] sm:$0xf]
          %v602 = vld [vmem:[%s429 + $0x4] sm:$0xf]
          %v603 = vld [vmem:[%s429 + $0x8] sm:$0xf]
          %v604 = vld [vmem:[%s429 + $0xc] sm:$0xf]
          %v605 = vld [vmem:[%s429 + $0x10] sm:$0xf]
          %v606 = vld [vmem:[%s429 + $0x14] sm:$0xf]
          %v607 = vld [vmem:[%s429 + $0x18] sm:$0xf]
          %v608 = vld [vmem:[%s429 + $0x1c] sm:$0xf]
          %v609 = vld [vmem:[%s414] sm:$0xf]
          %v610 = vld [vmem:[%s433] sm:$0xf]
          %vm611 = vcmask 64512
          %v613 = vsel %vm611, %v609, 0
          %vm615 = vcmask 1043456
          %v617 = vsel %vm615, %v610, 0
          %619 = vmatprep.subr.bf16.mxu0 0
          %620 = vmatpush1.bf16.msra.mxu0 %v617
          %621 = vmatprep.subr.bf16.mxu0 0
          %622 = vmatpush1.bf16.msra.mxu0 0
          %623 = vmatprep.subr.bf16.mxu0 0
          %624 = vmatpush1.bf16.msra.mxu0 0
          %625 = vmatprep.subr.bf16.mxu0 0
          %626 = vmatpush1.bf16.msra.mxu0 0
          %627 = vmatprep.subr.bf16.mxu0 0
          %628 = vmatpush1.bf16.msra.mxu0 0
          %629 = vmatprep.subr.bf16.mxu0 0
          %630 = vmatpush1.bf16.msra.mxu0 0
          %631 = vmatprep.subr.bf16.mxu0 0
          %632 = vmatpush1.bf16.msra.mxu0 0
          %633 = vmatprep.subr.bf16.mxu0 0
          %634 = vmatpush1.bf16.msra.mxu0 0
          %635 = vmatprep.subr.bf16.mxu0 0
          %636 = vmatpush1.bf16.msra.mxu0 0
          %637 = vmatprep.subr.bf16.mxu0 0
          %638 = vmatpush1.bf16.msra.mxu0 0
          %639 = vmatprep.subr.bf16.mxu0 0
          %640 = vmatpush1.bf16.msra.mxu0 0
          %641 = vmatprep.subr.bf16.mxu0 0
          %642 = vmatpush1.bf16.msra.mxu0 0
          %643 = vmatprep.subr.bf16.mxu0 0
          %644 = vmatpush1.bf16.msra.mxu0 0
          %645 = vmatprep.subr.bf16.mxu0 0
          %646 = vmatpush1.bf16.msra.mxu0 0
          %647 = vmatprep.subr.bf16.mxu0 0
          %648 = vmatpush1.bf16.msra.mxu0 0
          %649 = vmatprep.subr.bf16.mxu0 0
          %650 = vmatpush1.bf16.msra.mxu0 0
          %651 = vmatprep.mubr.bf16.mxu0 0
          %652 = vmatmul.mubr.bf16.gmra.mrb[0].mxu0 %v613
          %v653 = vpop.f32.mrb[0].mxu0
          %v654 = vadd.f32 0.0, %v653
          %v655 = vpop.f32.mrb[0].mxu0
          %v656 = vpop.f32.mrb[0].mxu0
          %v657 = vpop.f32.mrb[0].mxu0
          %658 = vdwg.mxu0
          %v667 = vunpack.c.l.b16 %v601
          %v668 = vunpack.c.l.b16 %v602
          %v669 = vunpack.c.l.b16 %v603
          %v670 = vunpack.c.l.b16 %v604
          %v671 = vunpack.c.l.b16 %v605
          %v672 = vunpack.c.l.b16 %v606
          %v673 = vunpack.c.l.b16 %v607
          %v674 = vunpack.c.l.b16 %v608
          %v675 = vpack.c.b16 %v668, %v667
          %v676 = vpack.c.b16 %v670, %v669
          %v677 = vpack.c.b16 %v672, %v671
          %v678 = vpack.c.b16 %v674, %v673
          %v684 = vsel %vm557, %v600, 0
          %686 = vmatprep.subr.bf16.mxu0 0
          %687 = vmatpush1.bf16.msra.mxu0 %v675
          %688 = vmatprep.subr.bf16.mxu0 0
          %689 = vmatpush1.bf16.msra.mxu0 %v676
          %690 = vmatprep.subr.bf16.mxu0 0
          %691 = vmatpush1.bf16.msra.mxu0 %v677
          %692 = vmatprep.subr.bf16.mxu0 0
          %693 = vmatpush1.bf16.msra.mxu0 %v678
          %694 = vmatprep.subr.bf16.mxu0 0
          %695 = vmatpush1.bf16.msra.mxu0 0
          %696 = vmatprep.subr.bf16.mxu0 0
          %697 = vmatpush1.bf16.msra.mxu0 0
          %698 = vmatprep.subr.bf16.mxu0 0
          %699 = vmatpush1.bf16.msra.mxu0 0
          %700 = vmatprep.subr.bf16.mxu0 0
          %701 = vmatpush1.bf16.msra.mxu0 0
          %702 = vmatprep.subr.bf16.mxu0 0
          %703 = vmatpush1.bf16.msra.mxu0 0
          %704 = vmatprep.subr.bf16.mxu0 0
          %705 = vmatpush1.bf16.msra.mxu0 0
          %706 = vmatprep.subr.bf16.mxu0 0
          %707 = vmatpush1.bf16.msra.mxu0 0
          %708 = vmatprep.subr.bf16.mxu0 0
          %709 = vmatpush1.bf16.msra.mxu0 0
          %710 = vmatprep.subr.bf16.mxu0 0
          %711 = vmatpush1.bf16.msra.mxu0 0
          %712 = vmatprep.subr.bf16.mxu0 0
          %713 = vmatpush1.bf16.msra.mxu0 0
          %714 = vmatprep.subr.bf16.mxu0 0
          %715 = vmatpush1.bf16.msra.mxu0 0
          %716 = vmatprep.subr.bf16.mxu0 0
          %717 = vmatpush1.bf16.msra.mxu0 0
          %718 = vmatprep.mubr.bf16.mxu0 0
          %719 = vmatmul.mubr.bf16.gmra.mrb[0].mxu0 %v684
          %v720 = vpop.f32.mrb[0].mxu0
          %v721 = vadd.f32 %v654, %v720
          %v722 = vpop.f32.mrb[0].mxu0
          %v723 = vpop.f32.mrb[0].mxu0
          %v724 = vpop.f32.mrb[0].mxu0
          %725 = vdwg.mxu0
          %v726 = vlaneseq
          %v727 = vshrl.u32 %v726, 7
          %v728 = vsub.s32 0, %v727
          %v729 = vrot.slane %v565, %v728
          %v730 = vadd.f32 %v721, %v729
          %v731 = vmax.f32 %v730, 0.0
          %v732 = vpack.c.bf16 %v731, %v731
          %v733 = vld [vmem:[%s438] sm:$0xf]
          %v734 = vld [vmem:[%s438 + $0x4] sm:$0xf]
          %v735 = vld [vmem:[%s438 + $0x8] sm:$0xf]
          %v736 = vld [vmem:[%s438 + $0xc] sm:$0xf]
          %v737 = vlaneseq
          %v738 = vshrl.u32 %v737, 7
          %v739 = vsub.s32 0, %v738
          %v740 = vrot.slane %v566, %v739
          %v745 = vunpack.c.l.b16 %v733
          %v746 = vunpack.c.l.b16 %v734
          %v747 = vunpack.c.l.b16 %v735
          %v748 = vunpack.c.l.b16 %v736
          %v749 = vpack.c.b16 %v746, %v745
          %v750 = vpack.c.b16 %v748, %v747
          %vm753 = vcmask 261120
          %v755 = vsel %vm753, %v732, 0
          %757 = vmatprep.subr.bf16.mxu0 0
          %758 = vmatpush1.bf16.msra.mxu0 %v749
          %759 = vmatprep.subr.bf16.mxu0 0
          %760 = vmatpush1.bf16.msra.mxu0 %v750
          %761 = vmatprep.subr.bf16.mxu0 0
          %762 = vmatpush1.bf16.msra.mxu0 0
          %763 = vmatprep.subr.bf16.mxu0 0
          %764 = vmatpush1.bf16.msra.mxu0 0
          %765 = vmatprep.subr.bf16.mxu0 0
          %766 = vmatpush1.bf16.msra.mxu0 0
          %767 = vmatprep.subr.bf16.mxu0 0
          %768 = vmatpush1.bf16.msra.mxu0 0
          %769 = vmatprep.subr.bf16.mxu0 0
          %770 = vmatpush1.bf16.msra.mxu0 0
          %771 = vmatprep.subr.bf16.mxu0 0
          %772 = vmatpush1.bf16.msra.mxu0 0
          %773 = vmatprep.subr.bf16.mxu0 0
          %774 = vmatpush1.bf16.msra.mxu0 0
          %775 = vmatprep.subr.bf16.mxu0 0
          %776 = vmatpush1.bf16.msra.mxu0 0
          %777 = vmatprep.subr.bf16.mxu0 0
          %778 = vmatpush1.bf16.msra.mxu0 0
          %779 = vmatprep.subr.bf16.mxu0 0
          %780 = vmatpush1.bf16.msra.mxu0 0
          %781 = vmatprep.subr.bf16.mxu0 0
          %782 = vmatpush1.bf16.msra.mxu0 0
          %783 = vmatprep.subr.bf16.mxu0 0
          %784 = vmatpush1.bf16.msra.mxu0 0
          %785 = vmatprep.subr.bf16.mxu0 0
          %786 = vmatpush1.bf16.msra.mxu0 0
          %787 = vmatprep.subr.bf16.mxu0 0
          %788 = vmatpush1.bf16.msra.mxu0 0
          %789 = vmatprep.mubr.bf16.mxu0 0
          %790 = vmatmul.mubr.bf16.gmra.mrb[0].mxu0 %v755
          %v791 = vpop.f32.mrb[0].mxu0
          %v792 = vadd.f32 %v740, %v791
          %v793 = vpop.f32.mrb[0].mxu0
          %v794 = vpop.f32.mrb[0].mxu0
          %v795 = vpop.f32.mrb[0].mxu0
          %796 = vdwg.mxu0
          %v797 = vmax.f32 %v792, 0.0
          %v798 = vlaneseq
          %v799 = vshrl.u32 %v798, 7
          %v800 = vsub.s32 0, %v799
          %v801 = vrot.slane %v567, %v800
          %v802 = vmul.f32 %v797, %v801
          %v803 = vsel %vm753, %v802, 0.0
          %804 = vadd.xlane.f32.xlu0 %v803
          %v805 = vpop.xlane.xlu0 %804
          %807 = vset.pattern.permute.xlu0 0
          %808 = vperm.xlu0 %807, %v568
          %v809 = vpop.permute.xlu0 %808
          %v810 = vlaneseq
          %v811 = vshrl.u32 %v810, 7
          %v812 = vsub.s32 0, %v811
          %v813 = vrot.slane %v809, %v812
          %v815 = vadd.f32 %v805, %v813
          %817 = vset.pattern.permute.xlu0 0
          %818 = vperm.xlu0 %817, %v815
          %v819 = vpop.permute.xlu0 %818
          %v820 = vlaneseq
          %v821 = vand.u32 %v820, 127
          %v822 = vlaneseq
          %v823 = vshrl.u32 %v822, 7
          %v824 = vsub.s32 %v821, %v823
          %v825 = vrot.slane %v819, %v824
          %vm827 = vcmask 57344
          %828 = vst.msk [vmem:[%s400] sm:$0x1] %vm827, %v825
        $region56: #{tpu_custom_call.1} parent=47 // pred_fallthru
          _
        %s829 = sand.u32 %s238, 1
        %s830 = scalar_lea.sflag [#allocation4], %s829
        %s831 = sand.u32 %s238, 1
        %s832 = scalar_lea.vmem [#allocation3], %s831
        // Predicated region
        $region57: #{tpu_custom_call.1} parent=47 // pred_check
          %p833 = pneg %p248
        $region58: #{tpu_custom_call.1} parent=47 // pred_check_branch
          %835 = sbr.rel (%p833) target = $region60
        $region59: #{tpu_custom_call.1} parent=47 // pred_region
          %s837 = ssub.s32 16, 16
          %838 = vsyncadd %s830, %s837
          %s839 = sadd.s32 %s27, %s26
          %s840 = smul.addr %s839, 16
          %s841 = scalar_lea.hbm %s7, %s840
          %s843 = sshll.u32 %s832, 4
          %s844 = int_to_ptr.vmem [resolvable:$true] %s843
          %846 = dma.vmem_to_hbm [thread:$0]  %s844, 16, %s841, %s830
        $region60: #{tpu_custom_call.1} parent=47 // pred_fallthru
          _
      $region48: #{tpu_custom_call.1} parent=5 // pred_fallthru
        _
      %p847 = scmp.le.s32.totalorder 2, %s16
      // Predicated region
      $region61: #{tpu_custom_call.1} parent=5 // pred_check
        %p848 = pneg %p847
      $region62: #{tpu_custom_call.1} parent=5 // pred_check_branch
        %850 = sbr.rel (%p848) target = $region64
      $region63: #{tpu_custom_call.1} parent=5 // pred_region
        %s851 = ssub.s32 %s16, 2
        // Predicated region
        $region65: #{tpu_custom_call.1} parent=63 // pred_check
          %p852 = pneg %p254
        $region66: #{tpu_custom_call.1} parent=63 // pred_check_branch
          %854 = sbr.rel (%p852) target = $region68
        $region67: #{tpu_custom_call.1} parent=63 // pred_region
          %s855 = sand.u32 %s239, 1
          %s856 = scalar_lea.sflag [#allocation4], %s855
          %s857 = sand.u32 %s239, 1
          %s858 = scalar_lea.vmem [#allocation3], %s857
          %859 = dma.done %s856, 16
        $region68: #{tpu_custom_call.1} parent=63 // pred_fallthru
          _
      $region64: #{tpu_custom_call.1} parent=5 // pred_fallthru
        _
    $region6: #{tpu_custom_call.1} parent=1 // loop_footer
      %s20 = sadd.s32 1, %s16
    $region7: #{tpu_custom_call.1} parent=1 // loop_footer_branch
      %15 = sbr.rel target = $region3
    $region8: #{tpu_custom_call.1} parent=1 // loop_exit
      _
    %860 = vsyncpa [#allocation4], 1
    %s861 = scalar_lea.sflag [#allocation4], 1
    %862 = vsyncpa %s861, 1

</llo_original>
